<compile_context>
chip_gen: v7x
topology: tpu7x:2x2x1
jax: 0.10.0
libtpu: 0.0.40
codegen_flags: <defaults>
</compile_context>

<pallas_src>
import functools
import math

import jax
import jax.numpy as jnp
from jax import lax
from jax.experimental import pallas as pl
from jax.experimental.pallas import tpu as pltpu


def _round_up(x, m):
    return ((x + m - 1) // m) * m


def _sepconv_kernel(*refs, KH, KW, TH, Wo, stride, dilation, halo, slab,
                    acc_dtype):
    """Fused depthwise(KHxKW) + pointwise(1x1) conv for one (image, H-strip).

    refs (halo > 0):
      x_ref    : (1, TH*stride, Wp, C)  main rows of the padded input strip
      halo_ref : (1, halo,      Wp, C)  extra rows below the strip (conv halo)
      dww_ref  : (KH, KW, C)            depthwise weights (input dtype)
      pww_ref  : (C, P)                 pointwise weights (matmul dtype)
      pwb_ref  : (1, P)                 fused (pw + dw) bias (f32)
      o_ref    : (1, TH, Wo, P)
      acc_ref  : (TH*Wo, C)             VMEM scratch, matmul dtype
    """
    if halo > 0:
        x_ref, halo_ref, dww_ref, pww_ref, pwb_ref, o_ref, acc_ref = refs
    else:
        x_ref, dww_ref, pww_ref, pwb_ref, o_ref, acc_ref = refs

    C = x_ref.shape[-1]
    P = o_ref.shape[-1]

    k_eff = (KH - 1) * dilation + 1
    rows_needed = (slab - 1) * stride + k_eff
    n_slabs = TH // slab
    n_main = n_slabs - 1 if halo > 0 else n_slabs

    dww = dww_ref[...]                              # (KH, KW, C), loaded once

    def depthwise_slab(rows):
        # rows: (rows_needed, Wp, C) in input dtype.  Taps multiply in the
        # input dtype (bf16 VALU on v6e/v7x for bf16 models), accumulate f32,
        # and the whole slab chain stays in vregs.
        acc = jnp.zeros((slab, Wo, C), jnp.float32)
        for kh in range(KH):
            for kw in range(KW):
                h0 = kh * dilation
                w0 = kw * dilation
                patch = lax.slice(
                    rows,
                    (h0, w0, 0),
                    (h0 + (slab - 1) * stride + 1,
                     w0 + (Wo - 1) * stride + 1, C),
                    (stride, stride, 1))            # (slab, Wo, C)
                acc = acc + (patch * dww[kh, kw]).astype(jnp.float32)
        return acc

    # --- slabs whose taps are entirely inside x_ref ---
    if n_main > 0:
        @pl.loop(0, n_main)
        def _(i):
            r0 = pl.multiple_of(i * (slab * stride), slab * stride)
            a0 = pl.multiple_of(i * (slab * Wo), slab * Wo)
            rows = x_ref[0, pl.ds(r0, rows_needed)]          # (rows_needed,Wp,C)
            acc = depthwise_slab(rows)
            acc_ref[pl.ds(a0, slab * Wo), :] = (
                acc.reshape(slab * Wo, C).astype(acc_dtype))

    # --- last slab: the only one that touches the halo rows ---
    if halo > 0:
        r0 = (n_slabs - 1) * slab * stride
        rows = jnp.concatenate(
            [x_ref[0, r0:TH * stride], halo_ref[0]], axis=0)  # (rows_needed,Wp,C)
        acc = depthwise_slab(rows)
        a0 = (n_slabs - 1) * slab * Wo
        acc_ref[a0:a0 + slab * Wo, :] = (
            acc.reshape(slab * Wo, C).astype(acc_dtype))

    # --- pointwise 1x1 conv: one big 2-D MXU matmul with f32 accumulation ---
    out2d = jnp.dot(acc_ref[...], pww_ref[...],
                    preferred_element_type=jnp.float32)       # (TH*Wo, P)
    out2d = out2d + pwb_ref[0, :]
    o_ref[0] = out2d.reshape(TH, Wo, P).astype(o_ref.dtype)


def separable_conv2d(x_nchw, dw_weight, dw_bias, pw_weight, pw_bias,
                     kernel_size=3, stride=1, dilation=1, block_h=None,
                     vmem_budget_bytes=None, pointwise_bf16=False):
    """x_nchw: (N,C,H,W); dw_weight: (C,1,K,K); pw_weight: (P,C,1,1)."""
    N, C, H, W = x_nchw.shape
    P = pw_weight.shape[0]
    KH = KW = kernel_size

    k_eff = kernel_size + (kernel_size - 1) * (dilation - 1)
    pad_total = k_eff - 1
    pad_beg = pad_total // 2
    pad_end = pad_total - pad_beg

    Hp = H + pad_total
    Wp = W + pad_total
    Ho = (Hp - k_eff) // stride + 1
    Wo = (Wp - k_eff) // stride + 1

    in_dtype = x_nchw.dtype
    in_it = jnp.dtype(in_dtype).itemsize
    mm_dtype = (jnp.bfloat16 if (in_dtype == jnp.bfloat16 or pointwise_bf16)
                else jnp.float32)
    acc_dtype = mm_dtype
    mm_it = jnp.dtype(mm_dtype).itemsize
    acc_it = mm_it

    # ---- sublane-align Wo so in-kernel reshapes are layout-preserving ----
    sub = 8 if acc_it >= 4 else (16 if acc_it == 2 else 32)
    Wo_pad = _round_up(Wo, sub)
    Wp_f = max(Wp, (Wo_pad - 1) * stride + k_eff)
    extra_w = Wp_f - Wp

    halo = max(k_eff - stride, 0)                    # extra rows below a strip
    align = halo // math.gcd(halo, stride) if halo > 0 else 1

    # ---- slab of output rows accumulated in vregs before one scratch store ----
    slab_min = -(-halo // stride) if halo > 0 else 1     # only last slab sees halo
    slab_vreg = max(1, (128 * 1024) // max(Wo_pad * C * 4, 1))
    slab = max(slab_min, min(8, slab_vreg))
    lcm_req = slab * align // math.gcd(slab, align)

    # ---- generation-aware VMEM budget / limit ----
    try:
        vmem_cap = int(pltpu.get_tpu_info().vmem_capacity_bytes)
    except Exception:
        vmem_cap = 128 * 1024 * 1024
    if vmem_budget_bytes is None:
        vmem_budget_bytes = max(16 << 20, min(48 << 20, vmem_cap // 3))

    rows_needed = (slab - 1) * stride + k_eff
    per_row = (2 * stride * Wp_f * C * in_it          # input strip (double-buffered)
               + 2 * Wo_pad * P * in_it               # output strip (double-buffered)
               + Wo_pad * C * acc_it                  # accumulator scratch
               + 4 * Wo_pad * P                       # f32 matmul result temporary
               + 4 * Wo_pad * C)                      # acc staging headroom
    fixed = (2 * halo * Wp_f * C * in_it              # halo block (double-buffered)
             + 2 * (KH * KW * C * in_it + C * P * mm_it + P * 4)   # weight blocks
             + 2 * rows_needed * Wp_f * C * max(in_it, 4)          # slab input temps
             + 12 * slab * Wo_pad * C)                             # slab acc + taps
    if block_h is None:
        block_h = max(lcm_req,
                      (int(vmem_budget_bytes) - fixed) // max(per_row, 1))

    TH = max(1, min(int(block_h), Ho))
    TH = _round_up(TH, lcm_req)
    if N == 1 and Ho > lcm_req:
        # keep >= 2 grid steps so both v7x TensorCores have work
        cap = max(lcm_req, (Ho // 2) // lcm_req * lcm_req)
        TH = min(TH, cap)
    num_t = -(-Ho // TH)
    Ho_pad = num_t * TH

    # ---- NCHW -> NHWC + fixed padding (+ extra rows/cols for tiles & halo) ----
    Hp_req = (Ho_pad - 1) * stride + k_eff
    extra_h = max(0, Hp_req - Hp)
    x_nhwc = jnp.transpose(x_nchw, (0, 2, 3, 1))
    xp = jnp.pad(x_nhwc, ((0, 0), (pad_beg, pad_end + extra_h),
                          (pad_beg, pad_end + extra_w), (0, 0)))

    # ---- weight prep: fold dw bias into pw bias; depthwise in model dtype ----
    dww = jnp.transpose(dw_weight[:, 0, :, :], (1, 2, 0)).astype(in_dtype)      # (KH,KW,C)
    pww_f32 = jnp.transpose(pw_weight[:, :, 0, 0], (1, 0)).astype(jnp.float32)  # (C,P)
    pwb_eff = (pw_bias.astype(jnp.float32)
               + dw_bias.astype(jnp.float32) @ pww_f32).reshape(1, P)
    pww = pww_f32.astype(mm_dtype)

    kernel = functools.partial(_sepconv_kernel, KH=KH, KW=KW, TH=TH, Wo=Wo_pad,
                               stride=stride, dilation=dilation, halo=halo,
                               slab=slab, acc_dtype=acc_dtype)

    x_spec = pl.BlockSpec((1, TH * stride, Wp_f, C), lambda n, t: (n, t, 0, 0))
    dww_spec = pl.BlockSpec((KH, KW, C), lambda n, t: (0, 0, 0))
    pww_spec = pl.BlockSpec((C, P), lambda n, t: (0, 0))
    pwb_spec = pl.BlockSpec((1, P), lambda n, t: (0, 0))
    out_spec = pl.BlockSpec((1, TH, Wo_pad, P), lambda n, t: (n, t, 0, 0))

    if halo > 0:
        halo_blocks_per_tile = TH * stride // halo       # exact by construction
        halo_spec = pl.BlockSpec(
            (1, halo, Wp_f, C),
            lambda n, t: (n, (t + 1) * halo_blocks_per_tile, 0, 0))
        in_specs = [x_spec, halo_spec, dww_spec, pww_spec, pwb_spec]
        inputs = (xp, xp, dww, pww, pwb_eff)
    else:
        in_specs = [x_spec, dww_spec, pww_spec, pwb_spec]
        inputs = (xp, dww, pww, pwb_eff)

    scratch_shapes = [pltpu.VMEM((TH * Wo_pad, C), acc_dtype)]

    est = fixed + per_row * TH
    vmem_limit = int(min(max(vmem_cap - (8 << 20), 16 << 20),
                         max(int(est * 1.3), 32 << 20)))

    flops = 2 * N * Ho_pad * Wo_pad * C * (KH * KW + P)
    bytes_accessed = (xp.size * in_it + dww.size * in_it + pww.size * mm_it
                      + pwb_eff.size * 4 + N * Ho_pad * Wo_pad * P * in_it)

    out_nhwc = pl.pallas_call(
        kernel,
        out_shape=jax.ShapeDtypeStruct((N, Ho_pad, Wo_pad, P), in_dtype),
        grid_spec=pltpu.PrefetchScalarGridSpec(
            num_scalar_prefetch=0,
            grid=(N, num_t),
            in_specs=in_specs,
            out_specs=out_spec,
            scratch_shapes=scratch_shapes,
        ),
        compiler_params=pltpu.CompilerParams(
            dimension_semantics=("parallel", "parallel"),
            vmem_limit_bytes=vmem_limit),
        cost_estimate=pl.CostEstimate(flops=flops, transcendentals=0,
                                      bytes_accessed=bytes_accessed),
    )(*inputs)

    out_nhwc = out_nhwc[:, :Ho, :Wo]
    return jnp.transpose(out_nhwc, (0, 3, 1, 2))          # NHWC -> NCHW


def _reference(x_nchw, dw_weight, dw_bias, pw_weight, pw_bias,
               kernel_size=3, stride=1, dilation=1):
    """Pure-JAX reference using lax.conv_general_dilated (NCHW)."""
    C = x_nchw.shape[1]
    k_eff = kernel_size + (kernel_size - 1) * (dilation - 1)
    pad_total = k_eff - 1
    pad_beg = pad_total // 2
    pad_end = pad_total - pad_beg
    xp = jnp.pad(x_nchw, ((0, 0), (0, 0), (pad_beg, pad_end), (pad_beg, pad_end)))
    y = lax.conv_general_dilated(
        xp, dw_weight, window_strides=(stride, stride), padding='VALID',
        rhs_dilation=(dilation, dilation), feature_group_count=C,
        dimension_numbers=('NCHW', 'OIHW', 'NCHW'))
    y = y + dw_bias[None, :, None, None]
    z = lax.conv_general_dilated(
        y, pw_weight, window_strides=(1, 1), padding='VALID',
        dimension_numbers=('NCHW', 'OIHW', 'NCHW'))
    return z + pw_bias[None, :, None, None]


if __name__ == "__main__":
    N, C, H, W = 2, 4, 16, 16
    P = 8
    K = 3

    key = jax.random.PRNGKey(0)
    k1, k2, k3, k4, k5 = jax.random.split(key, 5)

    x = jax.random.normal(k1, (N, C, H, W), dtype=jnp.float32)
    dw_weight = jax.random.normal(k2, (C, 1, K, K), dtype=jnp.float32) * 0.1
    dw_bias = jax.random.normal(k3, (C,), dtype=jnp.float32) * 0.1
    pw_weight = jax.random.normal(k4, (P, C, 1, 1), dtype=jnp.float32) * 0.1
    pw_bias = jax.random.normal(k5, (P,), dtype=jnp.float32) * 0.1

    ref = _reference(x, dw_weight, dw_bias, pw_weight, pw_bias,
                     kernel_size=K, stride=1, dilation=1)

    # Config 1: block_h=8 -> 2 H-strips/image (grid=(2,2)), halo-only slab path.
    out1 = separable_conv2d(x, dw_weight, dw_bias, pw_weight, pw_bias,
                            kernel_size=K, stride=1, dilation=1, block_h=8)
    out1 = jax.block_until_ready(out1)
    assert out1.shape == (N, P, H, W), out1.shape
    assert jnp.allclose(out1, ref, atol=1e-4, rtol=1e-4), \
        float(jnp.max(jnp.abs(out1 - ref)))

    # Config 2: derived tiling (whole image per strip) -> exercises the main
    # slab loop plus the halo slab epilogue.
    out2 = separable_conv2d(x, dw_weight, dw_bias, pw_weight, pw_bias,
                            kernel_size=K, stride=1, dilation=1)
    out2 = jax.block_until_ready(out2)
    assert out2.shape == (N, P, H, W), out2.shape
    assert jnp.allclose(out2, ref, atol=1e-4, rtol=1e-4), \
        float(jnp.max(jnp.abs(out2 - ref)))

    print("KERNEL_OK")
</pallas_src>

<mosaic_0001>
module attributes {stable_mosaic.version = 11 : i64} {
  func.func @_sepconv_kernel(%arg0: i32, %arg1: i32, %arg2: memref<1x8x18x4xf32, #tpu.memory_space<vmem>>, %arg3: memref<1x2x18x4xf32, #tpu.memory_space<vmem>>, %arg4: memref<3x3x4xf32, #tpu.memory_space<vmem>>, %arg5: memref<4x8xf32, #tpu.memory_space<vmem>>, %arg6: memref<1x8xf32, #tpu.memory_space<vmem>>, %arg7: memref<1x8x16x8xf32, #tpu.memory_space<vmem>>, %arg8: memref<128x4xf32, #tpu.memory_space<vmem>>) attributes {dimension_semantics = [#tpu.dimension_semantics<parallel>, #tpu.dimension_semantics<parallel>], iteration_bounds = array<i64: 2, 2>, scalar_prefetch = 0 : i64, scratch_operands = 1 : i64, tpu.core_type = #tpu.core_type<tc>, window_params = [{transform_indices = @transform_0, window_bounds = array<i64: 1, 8, 18, 4>}, {transform_indices = @transform_1, window_bounds = array<i64: 1, 2, 18, 4>}, {pipeline_mode = #tpu.pipeline_mode<synchronous>, transform_indices = @transform_2, window_bounds = array<i64: 3, 3, 4>}, {pipeline_mode = #tpu.pipeline_mode<synchronous>, transform_indices = @transform_3, window_bounds = array<i64: 4, 8>}, {pipeline_mode = #tpu.pipeline_mode<synchronous>, transform_indices = @transform_4, window_bounds = array<i64: 1, 8>}, {transform_indices = @transform_5, window_bounds = array<i64: 1, 8, 16, 8>}]} {
    %c0 = arith.constant 0 : index
    %c0_0 = arith.constant 0 : index
    %c0_1 = arith.constant 0 : index
    %0 = vector.load %arg4[%c0, %c0_0, %c0_1] : memref<3x3x4xf32, #tpu.memory_space<vmem>>, vector<3x3x4xf32>
    %c0_2 = arith.constant 0 : index
    %c0_3 = arith.constant 0 : index
    %c0_4 = arith.constant 0 : index
    %c0_5 = arith.constant 0 : index
    %1 = vector.load %arg2[%c0_2, %c0_3, %c0_4, %c0_5] : memref<1x8x18x4xf32, #tpu.memory_space<vmem>>, vector<1x8x18x4xf32>
    %2 = vector.shape_cast %1 : vector<1x8x18x4xf32> to vector<8x18x4xf32>
    %c0_6 = arith.constant 0 : index
    %c0_7 = arith.constant 0 : index
    %c0_8 = arith.constant 0 : index
    %c0_9 = arith.constant 0 : index
    %3 = vector.load %arg3[%c0_6, %c0_7, %c0_8, %c0_9] : memref<1x2x18x4xf32, #tpu.memory_space<vmem>>, vector<1x2x18x4xf32>
    %4 = vector.shape_cast %3 : vector<1x2x18x4xf32> to vector<2x18x4xf32>
    %5 = tpu.concatenate %2, %4 in 0 : vector<8x18x4xf32>, vector<2x18x4xf32> -> vector<10x18x4xf32>
    %cst = arith.constant 0.000000e+00 : f32
    %6 = vector.broadcast %cst : f32 to vector<8x16x4xf32>
    %7 = vector.extract_strided_slice %5 {offsets = [0, 0, 0], sizes = [8, 16, 4], strides = [1, 1, 1]} : vector<10x18x4xf32> to vector<8x16x4xf32>
    %8 = vector.extract_strided_slice %0 {offsets = [0, 0, 0], sizes = [1, 1, 4], strides = [1, 1, 1]} : vector<3x3x4xf32> to vector<1x1x4xf32>
    %9 = vector.shape_cast %8 : vector<1x1x4xf32> to vector<4xf32>
    %10 = vector.shape_cast %9 : vector<4xf32> to vector<1x1x4xf32>
    %11 = vector.broadcast %10 : vector<1x1x4xf32> to vector<8x16x4xf32>
    %12 = arith.mulf %7, %11 : vector<8x16x4xf32>
    %13 = arith.addf %6, %12 : vector<8x16x4xf32>
    %14 = vector.extract_strided_slice %5 {offsets = [0, 1, 0], sizes = [8, 16, 4], strides = [1, 1, 1]} : vector<10x18x4xf32> to vector<8x16x4xf32>
    %15 = vector.extract_strided_slice %0 {offsets = [0, 1, 0], sizes = [1, 1, 4], strides = [1, 1, 1]} : vector<3x3x4xf32> to vector<1x1x4xf32>
    %16 = vector.shape_cast %15 : vector<1x1x4xf32> to vector<4xf32>
    %17 = vector.shape_cast %16 : vector<4xf32> to vector<1x1x4xf32>
    %18 = vector.broadcast %17 : vector<1x1x4xf32> to vector<8x16x4xf32>
    %19 = arith.mulf %14, %18 : vector<8x16x4xf32>
    %20 = arith.addf %13, %19 : vector<8x16x4xf32>
    %21 = vector.extract_strided_slice %5 {offsets = [0, 2, 0], sizes = [8, 16, 4], strides = [1, 1, 1]} : vector<10x18x4xf32> to vector<8x16x4xf32>
    %22 = vector.extract_strided_slice %0 {offsets = [0, 2, 0], sizes = [1, 1, 4], strides = [1, 1, 1]} : vector<3x3x4xf32> to vector<1x1x4xf32>
    %23 = vector.shape_cast %22 : vector<1x1x4xf32> to vector<4xf32>
    %24 = vector.shape_cast %23 : vector<4xf32> to vector<1x1x4xf32>
    %25 = vector.broadcast %24 : vector<1x1x4xf32> to vector<8x16x4xf32>
    %26 = arith.mulf %21, %25 : vector<8x16x4xf32>
    %27 = arith.addf %20, %26 : vector<8x16x4xf32>
    %28 = vector.extract_strided_slice %5 {offsets = [1, 0, 0], sizes = [8, 16, 4], strides = [1, 1, 1]} : vector<10x18x4xf32> to vector<8x16x4xf32>
    %29 = vector.extract_strided_slice %0 {offsets = [1, 0, 0], sizes = [1, 1, 4], strides = [1, 1, 1]} : vector<3x3x4xf32> to vector<1x1x4xf32>
    %30 = vector.shape_cast %29 : vector<1x1x4xf32> to vector<4xf32>
    %31 = vector.shape_cast %30 : vector<4xf32> to vector<1x1x4xf32>
    %32 = vector.broadcast %31 : vector<1x1x4xf32> to vector<8x16x4xf32>
    %33 = arith.mulf %28, %32 : vector<8x16x4xf32>
    %34 = arith.addf %27, %33 : vector<8x16x4xf32>
    %35 = vector.extract_strided_slice %5 {offsets = [1, 1, 0], sizes = [8, 16, 4], strides = [1, 1, 1]} : vector<10x18x4xf32> to vector<8x16x4xf32>
    %36 = vector.extract_strided_slice %0 {offsets = [1, 1, 0], sizes = [1, 1, 4], strides = [1, 1, 1]} : vector<3x3x4xf32> to vector<1x1x4xf32>
    %37 = vector.shape_cast %36 : vector<1x1x4xf32> to vector<4xf32>
    %38 = vector.shape_cast %37 : vector<4xf32> to vector<1x1x4xf32>
    %39 = vector.broadcast %38 : vector<1x1x4xf32> to vector<8x16x4xf32>
    %40 = arith.mulf %35, %39 : vector<8x16x4xf32>
    %41 = arith.addf %34, %40 : vector<8x16x4xf32>
    %42 = vector.extract_strided_slice %5 {offsets = [1, 2, 0], sizes = [8, 16, 4], strides = [1, 1, 1]} : vector<10x18x4xf32> to vector<8x16x4xf32>
    %43 = vector.extract_strided_slice %0 {offsets = [1, 2, 0], sizes = [1, 1, 4], strides = [1, 1, 1]} : vector<3x3x4xf32> to vector<1x1x4xf32>
    %44 = vector.shape_cast %43 : vector<1x1x4xf32> to vector<4xf32>
    %45 = vector.shape_cast %44 : vector<4xf32> to vector<1x1x4xf32>
    %46 = vector.broadcast %45 : vector<1x1x4xf32> to vector<8x16x4xf32>
    %47 = arith.mulf %42, %46 : vector<8x16x4xf32>
    %48 = arith.addf %41, %47 : vector<8x16x4xf32>
    %49 = vector.extract_strided_slice %5 {offsets = [2, 0, 0], sizes = [8, 16, 4], strides = [1, 1, 1]} : vector<10x18x4xf32> to vector<8x16x4xf32>
    %50 = vector.extract_strided_slice %0 {offsets = [2, 0, 0], sizes = [1, 1, 4], strides = [1, 1, 1]} : vector<3x3x4xf32> to vector<1x1x4xf32>
    %51 = vector.shape_cast %50 : vector<1x1x4xf32> to vector<4xf32>
    %52 = vector.shape_cast %51 : vector<4xf32> to vector<1x1x4xf32>
    %53 = vector.broadcast %52 : vector<1x1x4xf32> to vector<8x16x4xf32>
    %54 = arith.mulf %49, %53 : vector<8x16x4xf32>
    %55 = arith.addf %48, %54 : vector<8x16x4xf32>
    %56 = vector.extract_strided_slice %5 {offsets = [2, 1, 0], sizes = [8, 16, 4], strides = [1, 1, 1]} : vector<10x18x4xf32> to vector<8x16x4xf32>
    %57 = vector.extract_strided_slice %0 {offsets = [2, 1, 0], sizes = [1, 1, 4], strides = [1, 1, 1]} : vector<3x3x4xf32> to vector<1x1x4xf32>
    %58 = vector.shape_cast %57 : vector<1x1x4xf32> to vector<4xf32>
    %59 = vector.shape_cast %58 : vector<4xf32> to vector<1x1x4xf32>
    %60 = vector.broadcast %59 : vector<1x1x4xf32> to vector<8x16x4xf32>
    %61 = arith.mulf %56, %60 : vector<8x16x4xf32>
    %62 = arith.addf %55, %61 : vector<8x16x4xf32>
    %63 = vector.extract_strided_slice %5 {offsets = [2, 2, 0], sizes = [8, 16, 4], strides = [1, 1, 1]} : vector<10x18x4xf32> to vector<8x16x4xf32>
    %64 = vector.extract_strided_slice %0 {offsets = [2, 2, 0], sizes = [1, 1, 4], strides = [1, 1, 1]} : vector<3x3x4xf32> to vector<1x1x4xf32>
    %65 = vector.shape_cast %64 : vector<1x1x4xf32> to vector<4xf32>
    %66 = vector.shape_cast %65 : vector<4xf32> to vector<1x1x4xf32>
    %67 = vector.broadcast %66 : vector<1x1x4xf32> to vector<8x16x4xf32>
    %68 = arith.mulf %63, %67 : vector<8x16x4xf32>
    %69 = arith.addf %62, %68 : vector<8x16x4xf32>
    %70 = vector.shape_cast %69 : vector<8x16x4xf32> to vector<128x4xf32>
    %c0_10 = arith.constant 0 : index
    %c0_11 = arith.constant 0 : index
    %71 = vector.load %arg8[%c0_10, %c0_11] : memref<128x4xf32, #tpu.memory_space<vmem>>, vector<128x4xf32>
    tpu.vector_store %arg8[%c0_10, %c0_11], %70 {strides = array<i32>} : memref<128x4xf32, #tpu.memory_space<vmem>>, vector<128x4xf32>,
    %c0_12 = arith.constant 0 : index
    %c0_13 = arith.constant 0 : index
    %72 = vector.load %arg8[%c0_12, %c0_13] : memref<128x4xf32, #tpu.memory_space<vmem>>, vector<128x4xf32>
    %c0_14 = arith.constant 0 : index
    %c0_15 = arith.constant 0 : index
    %73 = vector.load %arg5[%c0_14, %c0_15] : memref<4x8xf32, #tpu.memory_space<vmem>>, vector<4x8xf32>
    %cst_16 = arith.constant dense<0.000000e+00> : vector<128x8xf32>
    %74 = tpu.matmul %72, %73, %cst_16 {dimension_numbers = #tpu.dot_dimension_numbers<[1], [0], [0], [1], [0, 0, 1, 1], [], []>} : vector<128x4xf32>, vector<4x8xf32>, vector<128x8xf32> -> vector<128x8xf32>
    %c0_17 = arith.constant 0 : index
    %c0_18 = arith.constant 0 : index
    %75 = vector.load %arg6[%c0_17, %c0_18] : memref<1x8xf32, #tpu.memory_space<vmem>>, vector<1x8xf32>
    %76 = vector.shape_cast %75 : vector<1x8xf32> to vector<8xf32>
    %77 = vector.shape_cast %76 : vector<8xf32> to vector<1x8xf32>
    %78 = vector.broadcast %77 : vector<1x8xf32> to vector<128x8xf32>
    %79 = arith.addf %74, %78 : vector<128x8xf32>
    %80 = vector.shape_cast %79 : vector<128x8xf32> to vector<8x16x8xf32>
    %c0_19 = arith.constant 0 : index
    %c0_20 = arith.constant 0 : index
    %c0_21 = arith.constant 0 : index
    %c0_22 = arith.constant 0 : index
    %81 = vector.load %arg7[%c0_19, %c0_20, %c0_21, %c0_22] : memref<1x8x16x8xf32, #tpu.memory_space<vmem>>, vector<1x8x16x8xf32>
    %82 = vector.shape_cast %81 : vector<1x8x16x8xf32> to vector<8x16x8xf32>
    %83 = vector.shape_cast %80 : vector<8x16x8xf32> to vector<1x8x16x8xf32>
    tpu.vector_store %arg7[%c0_19, %c0_20, %c0_21, %c0_22], %83 {strides = array<i32>} : memref<1x8x16x8xf32, #tpu.memory_space<vmem>>, vector<1x8x16x8xf32>,
    return
  }
  func.func @transform_0(%arg0: i32, %arg1: i32) -> (i32, i32, i32, i32) {
    %c0_i32 = arith.constant 0 : i32
    %c0_i32_0 = arith.constant 0 : i32
    %c0_i32_1 = arith.constant 0 : i32
    return %arg0, %arg1, %c0_i32, %c0_i32_0 : i32, i32, i32, i32
  }
  func.func @transform_1(%arg0: i32, %arg1: i32) -> (i32, i32, i32, i32) {
    %c1_i32 = arith.constant 1 : i32
    %0 = arith.addi %arg1, %c1_i32 : i32
    %c4_i32 = arith.constant 4 : i32
    %1 = arith.muli %0, %c4_i32 : i32
    %c0_i32 = arith.constant 0 : i32
    %c0_i32_0 = arith.constant 0 : i32
    %c0_i32_1 = arith.constant 0 : i32
    return %arg0, %1, %c0_i32, %c0_i32_0 : i32, i32, i32, i32
  }
  func.func @transform_2(%arg0: i32, %arg1: i32) -> (i32, i32, i32) {
    %c0_i32 = arith.constant 0 : i32
    %c0_i32_0 = arith.constant 0 : i32
    %c0_i32_1 = arith.constant 0 : i32
    %c0_i32_2 = arith.constant 0 : i32
    return %c0_i32, %c0_i32_0, %c0_i32_1 : i32, i32, i32
  }
  func.func @transform_3(%arg0: i32, %arg1: i32) -> (i32, i32) {
    %c0_i32 = arith.constant 0 : i32
    %c0_i32_0 = arith.constant 0 : i32
    %c0_i32_1 = arith.constant 0 : i32
    return %c0_i32, %c0_i32_0 : i32, i32
  }
  func.func @transform_4(%arg0: i32, %arg1: i32) -> (i32, i32) {
    %c0_i32 = arith.constant 0 : i32
    %c0_i32_0 = arith.constant 0 : i32
    %c0_i32_1 = arith.constant 0 : i32
    return %c0_i32, %c0_i32_0 : i32, i32
  }
  func.func @transform_5(%arg0: i32, %arg1: i32) -> (i32, i32, i32, i32) {
    %c0_i32 = arith.constant 0 : i32
    %c0_i32_0 = arith.constant 0 : i32
    %c0_i32_1 = arith.constant 0 : i32
    return %arg0, %arg1, %c0_i32, %c0_i32_0 : i32, i32, i32, i32
  }
}

</mosaic_0001>

<llo_original>
// kernel: tpu_custom_call.1
$region0: #{tpu_custom_call.1}
  #allocation0 [shape = 'u32[]', space=smem, size = 0x4, offset = 0x4, fixed_abs, tag = 'smem constant byte address 0x4 - core index']
  #allocation1 [shape = 'u32[144,128]{1,0:T(1,128)}', space=vmem, size = 0x12000, scoped, tag = 'internal scratch']
  #allocation2 [shape = 'f32[128,4]{1,0:T(8,128)}', space=vmem, size = 0x10000, scoped, tag = 'scratch operand']
  %s0 = inlined_call_operand.vmem [shape: f32[2,18,18,4], index: 0, kind: input, shape index: {}]
  %s1 = inlined_call_operand.vmem [shape: f32[2,18,18,4], index: 1, kind: input, shape index: {}]
  %s2 = inlined_call_operand.vmem [shape: f32[3,3,4], index: 2, kind: input, shape index: {}]
  %s3 = inlined_call_operand.vmem [shape: f32[4,8], index: 3, kind: input, shape index: {}]
  %s4 = inlined_call_operand.vmem [shape: f32[1,8], index: 4, kind: input, shape index: {}]
  %s5 = inlined_call_operand.vmem [shape: f32[2,16,16,8], index: 5, kind: output, shape index: {}]
  %s6 = sld [smem:[#allocation0]]
  $region53: #{tpu_custom_call.1} parent=0
    _
  %s8 = ssub.s32 1, %s6
  %s9 = scalar_select 0, %s8, %s6
  loop: start=0, step=1, limit=6
  $region2: #{tpu_custom_call.1} parent=0 // loop_pre_header
    _
  $region3: #{tpu_custom_call.1} parent=0 // loop_header
    %s11 = sphi 0, %s15
    %p12 = scmp.ge.s32.totalorder %s11, 6
    %s18 = sphi 0, %s30
    %s19 = sphi 0, %s26
    %s20 = sphi 0, %s18
    %s21 = sphi 0, %s19
    %s22 = sphi 0, %s20
    %s23 = sphi 0, %s21
    %s35 = sphi 0, %s37
    %s38 = sphi 0, %s35
    %s39 = sphi 0, %s38
    %s55 = sphi 0, %s39
    %s67 = sphi 0, %s69
    %s70 = sphi 0, %s67
    %s71 = sphi 0, %s70
    %s87 = sphi 0, %s71
    %s91 = sphi 0, %s91
    %s93 = sphi 0, %s91
    %s94 = sphi 0, %s93
    %s108 = sphi 0, %s94
    %s112 = sphi 0, %s112
    %s114 = sphi 0, %s112
    %s115 = sphi 0, %s114
    %s129 = sphi 0, %s115
    %s133 = sphi 0, %s133
    %s135 = sphi 0, %s133
    %s136 = sphi 0, %s135
    %s150 = sphi 0, %s136
    %s158 = sphi 0, %s160
    %s161 = sphi 0, %s158
    %s162 = sphi 0, %s161
    %s178 = sphi 0, %s162
  $region4: #{tpu_custom_call.1} parent=0 // loop_header_branch
    %14 = sbr.rel (%p12) target = $region8
  $region5: #{tpu_custom_call.1} parent=0 // loop_body
    %s16 = ssub.s32 %s11, 1
    %s17 = ssub.s32 %s11, 2
    %s24 = sadd.s32 1, %s19
    %p25 = scmp.ge.s32.totalorder %s24, 2
    %s26 = scalar_select %p25, 0, %s24
    %s27 = sadd.s32 1, %s18
    %s28 = scalar_select %p25, %s27, %s18
    %p29 = scmp.ge.s32.totalorder %s28, 2
    %s30 = scalar_select %p29, 0, %s28
    %s31 = ssub.s32 %s18, %s30
    %s32 = ssub.s32 %s19, %s26
    %s33 = sor.u32 %s31, %s32
    %p34 = scmp.eq.s32.totalorder %s33, 0
    %s36 = sadd.s32 %s35, 1
    %s37 = scalar_select %p34, %s35, %s36
    %p40 = pneg %p34
    %p41 = scmp.eq.s32.totalorder %s11, 3
    %p42 = por %p40, %p41
    %p43 = scmp.ne.s32.totalorder %s35, %s38
    %p44 = scmp.eq.s32.totalorder %s11, 0
    %p45 = por %p43, %p44
    %p46 = scmp.ne.s32.totalorder %s35, %s38
    %p47 = scmp.eq.s32.totalorder %s16, 3
    %p48 = por %p46, %p47
    %p49 = scmp.ne.s32.totalorder %s38, %s39
    %p50 = scmp.eq.s32.totalorder %s16, 0
    %p51 = por %p49, %p50
    %p52 = scmp.ne.s32.totalorder %s38, %s39
    %p53 = scmp.eq.s32.totalorder %s17, 3
    %p54 = por %p52, %p53
    %p56 = scmp.ne.s32.totalorder %s39, %s55
    %p57 = scmp.eq.s32.totalorder %s17, 0
    %p58 = por %p56, %p57
    %s59 = sadd.s32 %s19, 1
    %s60 = smul.u32 %s59, 4
    %s61 = sadd.s32 %s26, 1
    %s62 = smul.u32 %s61, 4
    %s63 = ssub.s32 %s18, %s30
    %s64 = ssub.s32 %s60, %s62
    %s65 = sor.u32 %s63, %s64
    %p66 = scmp.eq.s32.totalorder %s65, 0
    %s68 = sadd.s32 %s67, 1
    %s69 = scalar_select %p66, %s67, %s68
    %p72 = pneg %p66
    %p73 = scmp.eq.s32.totalorder %s11, 3
    %p74 = por %p72, %p73
    %p75 = scmp.ne.s32.totalorder %s67, %s70
    %p76 = scmp.eq.s32.totalorder %s11, 0
    %p77 = por %p75, %p76
    %p78 = scmp.ne.s32.totalorder %s67, %s70
    %p79 = scmp.eq.s32.totalorder %s16, 3
    %p80 = por %p78, %p79
    %p81 = scmp.ne.s32.totalorder %s70, %s71
    %p82 = scmp.eq.s32.totalorder %s16, 0
    %p83 = por %p81, %p82
    %p84 = scmp.ne.s32.totalorder %s70, %s71
    %p85 = scmp.eq.s32.totalorder %s17, 3
    %p86 = por %p84, %p85
    %p88 = scmp.ne.s32.totalorder %s71, %s87
    %p89 = scmp.eq.s32.totalorder %s17, 0
    %p90 = por %p88, %p89
    %s92 = sadd.s32 %s91, 1
    %p95 = scmp.eq.s32.totalorder %s11, 3
    %p96 = scmp.ne.s32.totalorder %s91, %s93
    %p97 = scmp.eq.s32.totalorder %s11, 0
    %p98 = por %p96, %p97
    %p99 = scmp.ne.s32.totalorder %s91, %s93
    %p100 = scmp.eq.s32.totalorder %s16, 3
    %p101 = por %p99, %p100
    %p102 = scmp.ne.s32.totalorder %s93, %s94
    %p103 = scmp.eq.s32.totalorder %s16, 0
    %p104 = por %p102, %p103
    %p105 = scmp.ne.s32.totalorder %s93, %s94
    %p106 = scmp.eq.s32.totalorder %s17, 3
    %p107 = por %p105, %p106
    %p109 = scmp.ne.s32.totalorder %s94, %s108
    %p110 = scmp.eq.s32.totalorder %s17, 0
    %p111 = por %p109, %p110
    %s113 = sadd.s32 %s112, 1
    %p116 = scmp.eq.s32.totalorder %s11, 3
    %p117 = scmp.ne.s32.totalorder %s112, %s114
    %p118 = scmp.eq.s32.totalorder %s11, 0
    %p119 = por %p117, %p118
    %p120 = scmp.ne.s32.totalorder %s112, %s114
    %p121 = scmp.eq.s32.totalorder %s16, 3
    %p122 = por %p120, %p121
    %p123 = scmp.ne.s32.totalorder %s114, %s115
    %p124 = scmp.eq.s32.totalorder %s16, 0
    %p125 = por %p123, %p124
    %p126 = scmp.ne.s32.totalorder %s114, %s115
    %p127 = scmp.eq.s32.totalorder %s17, 3
    %p128 = por %p126, %p127
    %p130 = scmp.ne.s32.totalorder %s115, %s129
    %p131 = scmp.eq.s32.totalorder %s17, 0
    %p132 = por %p130, %p131
    %s134 = sadd.s32 %s133, 1
    %p137 = scmp.eq.s32.totalorder %s11, 3
    %p138 = scmp.ne.s32.totalorder %s133, %s135
    %p139 = scmp.eq.s32.totalorder %s11, 0
    %p140 = por %p138, %p139
    %p141 = scmp.ne.s32.totalorder %s133, %s135
    %p142 = scmp.eq.s32.totalorder %s16, 3
    %p143 = por %p141, %p142
    %p144 = scmp.ne.s32.totalorder %s135, %s136
    %p145 = scmp.eq.s32.totalorder %s16, 0
    %p146 = por %p144, %p145
    %p147 = scmp.ne.s32.totalorder %s135, %s136
    %p148 = scmp.eq.s32.totalorder %s17, 3
    %p149 = por %p147, %p148
    %p151 = scmp.ne.s32.totalorder %s136, %s150
    %p152 = scmp.eq.s32.totalorder %s17, 0
    %p153 = por %p151, %p152
    %s154 = ssub.s32 %s18, %s30
    %s155 = ssub.s32 %s19, %s26
    %s156 = sor.u32 %s154, %s155
    %p157 = scmp.eq.s32.totalorder %s156, 0
    %s159 = sadd.s32 %s158, 1
    %s160 = scalar_select %p157, %s158, %s159
    %p163 = pneg %p157
    %p164 = scmp.eq.s32.totalorder %s11, 3
    %p165 = por %p163, %p164
    %p166 = scmp.ne.s32.totalorder %s158, %s161
    %p167 = scmp.eq.s32.totalorder %s11, 0
    %p168 = por %p166, %p167
    %p169 = scmp.ne.s32.totalorder %s158, %s161
    %p170 = scmp.eq.s32.totalorder %s16, 3
    %p171 = por %p169, %p170
    %p172 = scmp.ne.s32.totalorder %s161, %s162
    %p173 = scmp.eq.s32.totalorder %s16, 0
    %p174 = por %p172, %p173
    %p175 = scmp.ne.s32.totalorder %s161, %s162
    %p176 = scmp.eq.s32.totalorder %s17, 3
    %p177 = por %p175, %p176
    %p179 = scmp.ne.s32.totalorder %s162, %s178
    %p180 = scmp.eq.s32.totalorder %s17, 0
    %p181 = por %p179, %p180
    %p182 = scmp.le.s32.totalorder 1, %s11
    %p183 = scmp.lt.s32.totalorder %s11, 5
    %p184 = pnand %p182, %p183
    %p185 = pneg %p184
    // Predicated region
    $region9: #{tpu_custom_call.1} parent=5 // pred_check
      _
    $region10: #{tpu_custom_call.1} parent=5 // pred_check_branch
      %187 = sbr.rel (%p184) target = $region12
    $region11: #{tpu_custom_call.1} parent=5 // pred_region
      %s188 = ssub.s32 %s11, 1
      // Predicated region
      $region13: #{tpu_custom_call.1} parent=11 // pred_check
        %p189 = pneg %p104
      $region14: #{tpu_custom_call.1} parent=11 // pred_check_branch
        %191 = sbr.rel (%p189) target = $region16
      $region15: #{tpu_custom_call.1} parent=11 // pred_region
        _
      $region16: #{tpu_custom_call.1} parent=11 // pred_fallthru
        _
      // Predicated region
      $region17: #{tpu_custom_call.1} parent=11 // pred_check
        %p192 = pneg %p125
      $region18: #{tpu_custom_call.1} parent=11 // pred_check_branch
        %194 = sbr.rel (%p192) target = $region20
      $region19: #{tpu_custom_call.1} parent=11 // pred_region
        _
      $region20: #{tpu_custom_call.1} parent=11 // pred_fallthru
        _
      // Predicated region
      $region21: #{tpu_custom_call.1} parent=11 // pred_check
        %p195 = pneg %p146
      $region22: #{tpu_custom_call.1} parent=11 // pred_check_branch
        %197 = sbr.rel (%p195) target = $region24
      $region23: #{tpu_custom_call.1} parent=11 // pred_region
        _
      $region24: #{tpu_custom_call.1} parent=11 // pred_fallthru
        _
    $region12: #{tpu_custom_call.1} parent=5 // pred_fallthru
      _
    %p198 = scmp.lt.s32.totalorder %s11, 4
    // Predicated region
    $region25: #{tpu_custom_call.1} parent=5 // pred_check
      %p199 = pneg %p198
    $region26: #{tpu_custom_call.1} parent=5 // pred_check_branch
      %201 = sbr.rel (%p199) target = $region28
    $region27: #{tpu_custom_call.1} parent=5 // pred_region
      // Predicated region
      $region29: #{tpu_custom_call.1} parent=27 // pred_check
        %p202 = pneg %p45
      $region30: #{tpu_custom_call.1} parent=27 // pred_check_branch
        %204 = sbr.rel (%p202) target = $region32
      $region31: #{tpu_custom_call.1} parent=27 // pred_region
        %s205 = smul.u32 8, %s19
        %s206 = ssub.s32 18, %s205
        %p207 = scmp.lt.s32.totalorder %s206, 8
        %s208 = scalar_select %p207, %s206, 8
        %s209 = smul.u32 128, %s208
        %s210 = smul.u32 %s209, 3
        %p211 = scmp.lt.s32.totalorder %s18, 1
        %s212 = scalar_select %p211, %s18, 1
        %p213 = scmp.lt.s32.totalorder %s205, 17
        %s214 = scalar_select %p213, %s205, 17
        %s215 = smul.addr %s214, 3
        %s216 = smul.addr %s212, 54
        %s217 = sadd.s32 %s215, %s216
        %s218 = smul.addr %s217, 8
        %s219 = scalar_lea.vmem %s0, %s218
        %s220 = smul.u32 8, %s19
        %s221 = ssub.s32 18, %s220
        %p222 = scmp.lt.s32.totalorder %s221, 8
        %s223 = scalar_select %p222, %s221, 8
        %s224 = smul.u32 128, %s223
        %s225 = smul.u32 %s224, 3
      $region32: #{tpu_custom_call.1} parent=27 // pred_fallthru
        _
      // Predicated region
      $region33: #{tpu_custom_call.1} parent=27 // pred_check
        %p226 = pneg %p77
      $region34: #{tpu_custom_call.1} parent=27 // pred_check_branch
        %228 = sbr.rel (%p226) target = $region36
      $region35: #{tpu_custom_call.1} parent=27 // pred_region
        %s229 = sadd.s32 %s19, 1
        %s230 = smul.u32 %s229, 4
        %s231 = smul.u32 2, %s230
        %p232 = scmp.lt.s32.totalorder %s18, 1
        %s233 = scalar_select %p232, %s18, 1
        %p234 = scmp.lt.s32.totalorder %s231, 17
        %s235 = scalar_select %p234, %s231, 17
        %s236 = smul.addr %s235, 3
        %s237 = smul.addr %s233, 54
        %s238 = sadd.s32 %s236, %s237
        %s239 = smul.addr %s238, 8
        %s240 = scalar_lea.vmem %s1, %s239
        %s241 = sadd.s32 %s19, 1
        %s242 = smul.u32 %s241, 4
        %s243 = smul.u32 2, %s242
      $region36: #{tpu_custom_call.1} parent=27 // pred_fallthru
        _
    $region28: #{tpu_custom_call.1} parent=5 // pred_fallthru
      _
    %p244 = scmp.le.s32.totalorder 1, %s11
    %p245 = scmp.lt.s32.totalorder %s11, 5
    %p246 = pnand %p244, %p245
    %p247 = pneg %p246
    // Predicated region
    $region37: #{tpu_custom_call.1} parent=5 // pred_check
      _
    $region38: #{tpu_custom_call.1} parent=5 // pred_check_branch
      %249 = sbr.rel (%p246) target = $region40
    $region39: #{tpu_custom_call.1} parent=5 // pred_region
      %s250 = ssub.s32 %s11, 1
      %s251 = smul.u32 8, %s21
      %s252 = ssub.s32 18, %s251
      %p253 = scmp.lt.s32.totalorder %s252, 8
      %s254 = scalar_select %p253, %s252, 8
      %s255 = smul.u32 128, %s254
      %s256 = smul.u32 %s255, 3
      %p257 = scmp.lt.s32.totalorder %s20, 1
      %s258 = scalar_select %p257, %s20, 1
      %p259 = scmp.lt.s32.totalorder %s251, 17
      %s260 = scalar_select %p259, %s251, 17
      %s261 = smul.addr %s260, 3
      %s262 = smul.addr %s258, 54
      %s263 = sadd.s32 %s261, %s262
      %s264 = smul.addr %s263, 8
      %s265 = scalar_lea.vmem %s0, %s264
      %p266 = pneg %p51
      %p267 = pneg %p48
      %s268 = sadd.s32 %s21, 1
      %s269 = smul.u32 %s268, 4
      %s270 = smul.u32 2, %s269
      %p271 = scmp.lt.s32.totalorder %s20, 1
      %s272 = scalar_select %p271, %s20, 1
      %p273 = scmp.lt.s32.totalorder %s270, 17
      %s274 = scalar_select %p273, %s270, 17
      %s275 = smul.addr %s274, 3
      %s276 = smul.addr %s272, 54
      %s277 = sadd.s32 %s275, %s276
      %s278 = smul.addr %s277, 8
      %s279 = scalar_lea.vmem %s1, %s278
      %p280 = pneg %p83
      %p281 = pneg %p80
      %p282 = pneg %p104
      %p283 = pneg %p101
      %p284 = pneg %p125
      %p285 = pneg %p122
      %p286 = pneg %p146
      %p287 = pneg %p143
      %p288 = pneg %p174
      %p289 = pneg %p171
      %s290 = smul.u32 8, %s21
      %p291 = scmp.lt.s32.totalorder %s20, 1
      %s292 = scalar_select %p291, %s20, 1
      %p293 = scmp.lt.s32.totalorder %s290, 15
      %s294 = scalar_select %p293, %s290, 15
      %s295 = smul.addr %s294, 2
      %s296 = smul.addr %s292, 32
      %s297 = sadd.s32 %s295, %s296
      %s298 = smul.addr %s297, 8
      %s299 = scalar_lea.vmem %s5, %s298
      %s300 = smul.u32 8, %s21
      %s301 = ssub.s32 18, %s300
      %p302 = scmp.lt.s32.totalorder %s301, 8
      %s303 = scalar_select %p302, %s301, 8
      %s304 = smul.u32 128, %s303
      %s305 = smul.u32 %s304, 3
      %p306 = scmp.lt.s32.totalorder %s20, 1
      %s307 = scalar_select %p306, %s20, 1
      %p308 = scmp.lt.s32.totalorder %s300, 17
      %s309 = scalar_select %p308, %s300, 17
      %s310 = smul.addr %s309, 3
      %s311 = smul.addr %s307, 54
      %s312 = sadd.s32 %s310, %s311
      %s313 = smul.addr %s312, 8
      %s314 = scalar_lea.vmem %s0, %s313
      %s315 = smul.u32 8, %s21
      %s316 = ssub.s32 18, %s315
      %p317 = scmp.lt.s32.totalorder %s316, 8
      %s318 = scalar_select %p317, %s316, 8
      %s319 = smul.u32 128, %s318
      %s320 = smul.u32 %s319, 3
      %s321 = sadd.s32 %s21, 1
      %s322 = smul.u32 %s321, 4
      %s323 = smul.u32 2, %s322
      %p324 = scmp.lt.s32.totalorder %s20, 1
      %s325 = scalar_select %p324, %s20, 1
      %p326 = scmp.lt.s32.totalorder %s323, 17
      %s327 = scalar_select %p326, %s323, 17
      %s328 = smul.addr %s327, 3
      %s329 = smul.addr %s325, 54
      %s330 = sadd.s32 %s328, %s329
      %s331 = smul.addr %s330, 8
      %s332 = scalar_lea.vmem %s1, %s331
      %s333 = sadd.s32 %s21, 1
      %s334 = smul.u32 %s333, 4
      %s335 = smul.u32 2, %s334
      %s336 = smul.u32 8, %s21
      %p337 = scmp.lt.s32.totalorder %s20, 1
      %s338 = scalar_select %p337, %s20, 1
      %p339 = scmp.lt.s32.totalorder %s336, 15
      %s340 = scalar_select %p339, %s336, 15
      %s341 = smul.addr %s340, 2
      %s342 = smul.addr %s338, 32
      %s343 = sadd.s32 %s341, %s342
      %s344 = smul.addr %s343, 8
      %s345 = scalar_lea.vmem %s5, %s344
      %s346 = smul.u32 8, %s21
      %v347 = vld [vmem:[%s2] sm:$0x7]
      %v348 = vld [vmem:[%s2 + $0x4] sm:$0x7]
      %v349 = vld [vmem:[%s2 + $0x8] sm:$0x7]
      %v350 = vld [vmem:[%s314] sm:$0xff]
      %v351 = vld [vmem:[%s314 + $0x8] sm:$0xff]
      %v352 = vld [vmem:[%s314 + $0x10] sm:$0x3]
      %v353 = vld [vmem:[%s314 + $0x18] sm:$0xff]
      %v354 = vld [vmem:[%s314 + $0x20] sm:$0xff]
      %v355 = vld [vmem:[%s314 + $0x28] sm:$0x3]
      %v356 = vld [vmem:[%s314 + $0x30] sm:$0xff]
      %v357 = vld [vmem:[%s314 + $0x38] sm:$0xff]
      %v358 = vld [vmem:[%s314 + $0x40] sm:$0x3]
      %v359 = vld [vmem:[%s314 + $0x48] sm:$0xff]
      %v360 = vld [vmem:[%s314 + $0x50] sm:$0xff]
      %v361 = vld [vmem:[%s314 + $0x58] sm:$0x3]
      %v362 = vld [vmem:[%s314 + $0x60] sm:$0xff]
      %v363 = vld [vmem:[%s314 + $0x68] sm:$0xff]
      %v364 = vld [vmem:[%s314 + $0x70] sm:$0x3]
      %v365 = vld [vmem:[%s314 + $0x78] sm:$0xff]
      %v366 = vld [vmem:[%s314 + $0x80] sm:$0xff]
      %v367 = vld [vmem:[%s314 + $0x88] sm:$0x3]
      %v368 = vld [vmem:[%s314 + $0x90] sm:$0xff]
      %v369 = vld [vmem:[%s314 + $0x98] sm:$0xff]
      %v370 = vld [vmem:[%s314 + $0xa0] sm:$0x3]
      %v371 = vld [vmem:[%s314 + $0xa8] sm:$0xff]
      %v372 = vld [vmem:[%s314 + $0xb0] sm:$0xff]
      %v373 = vld [vmem:[%s314 + $0xb8] sm:$0x3]
      %v374 = vld [vmem:[%s332] sm:$0xff]
      %v375 = vld [vmem:[%s332 + $0x8] sm:$0xff]
      %v376 = vld [vmem:[%s332 + $0x10] sm:$0x3]
      %v377 = vld [vmem:[%s332 + $0x18] sm:$0xff]
      %v378 = vld [vmem:[%s332 + $0x20] sm:$0xff]
      %v379 = vld [vmem:[%s332 + $0x28] sm:$0x3]
      %v380 = vlaneseq
      %v381 = vshrl.u32 %v380, 7
      %v382 = vsub.s32 0, %v381
      %v383 = vrot.slane %v347, %v382
      %v384 = vmul.f32 %v350, %v383
      %v385 = vmul.f32 %v351, %v383
      %v386 = vmul.f32 %v353, %v383
      %v387 = vmul.f32 %v354, %v383
      %v388 = vmul.f32 %v356, %v383
      %v389 = vmul.f32 %v357, %v383
      %v390 = vmul.f32 %v359, %v383
      %v391 = vmul.f32 %v360, %v383
      %v392 = vmul.f32 %v362, %v383
      %v393 = vmul.f32 %v363, %v383
      %v394 = vmul.f32 %v365, %v383
      %v395 = vmul.f32 %v366, %v383
      %v396 = vmul.f32 %v368, %v383
      %v397 = vmul.f32 %v369, %v383
      %v398 = vmul.f32 %v371, %v383
      %v399 = vmul.f32 %v372, %v383
      %v400 = vadd.f32 %v384, 0.0
      %v401 = vadd.f32 %v385, 0.0
      %v402 = vadd.f32 %v386, 0.0
      %v403 = vadd.f32 %v387, 0.0
      %v404 = vadd.f32 %v388, 0.0
      %v405 = vadd.f32 %v389, 0.0
      %v406 = vadd.f32 %v390, 0.0
      %v407 = vadd.f32 %v391, 0.0
      %v408 = vadd.f32 %v392, 0.0
      %v409 = vadd.f32 %v393, 0.0
      %v410 = vadd.f32 %v394, 0.0
      %v411 = vadd.f32 %v395, 0.0
      %v412 = vadd.f32 %v396, 0.0
      %v413 = vadd.f32 %v397, 0.0
      %v414 = vadd.f32 %v398, 0.0
      %v415 = vadd.f32 %v399, 0.0
      %v416 = vlaneseq
      %v417 = vshrl.u32 %v416, 7
      %v418 = vsub.s32 1, %v417
      %v419 = vrot.slane %v347, %v418
      %v420 = vmul.f32 %v350, %v419
      %v421 = vmul.f32 %v351, %v419
      %v422 = vmul.f32 %v352, %v419
      %v423 = vmul.f32 %v353, %v419
      %v424 = vmul.f32 %v354, %v419
      %v425 = vmul.f32 %v355, %v419
      %v426 = vmul.f32 %v356, %v419
      %v427 = vmul.f32 %v357, %v419
      %v428 = vmul.f32 %v358, %v419
      %v429 = vmul.f32 %v359, %v419
      %v430 = vmul.f32 %v360, %v419
      %v431 = vmul.f32 %v361, %v419
      %v432 = vmul.f32 %v362, %v419
      %v433 = vmul.f32 %v363, %v419
      %v434 = vmul.f32 %v364, %v419
      %v435 = vmul.f32 %v365, %v419
      %v436 = vmul.f32 %v366, %v419
      %v437 = vmul.f32 %v367, %v419
      %v438 = vmul.f32 %v368, %v419
      %v439 = vmul.f32 %v369, %v419
      %v440 = vmul.f32 %v370, %v419
      %v441 = vmul.f32 %v371, %v419
      %v442 = vmul.f32 %v372, %v419
      %v443 = vmul.f32 %v373, %v419
      %vm468 = vcmask 1046528
      %v469 = vrot.slane %v420, 1
      %v470 = vrot.slane %v421, 1
      %v471 = vsel %vm468, %v469, %v470
      %v472 = vrot.slane %v422, 1
      %v473 = vsel %vm468, %v470, %v472
      %v474 = vrot.slane %v423, 1
      %v475 = vrot.slane %v424, 1
      %v476 = vsel %vm468, %v474, %v475
      %v477 = vrot.slane %v425, 1
      %v478 = vsel %vm468, %v475, %v477
      %v479 = vrot.slane %v426, 1
      %v480 = vrot.slane %v427, 1
      %v481 = vsel %vm468, %v479, %v480
      %v482 = vrot.slane %v428, 1
      %v483 = vsel %vm468, %v480, %v482
      %v484 = vrot.slane %v429, 1
      %v485 = vrot.slane %v430, 1
      %v486 = vsel %vm468, %v484, %v485
      %v487 = vrot.slane %v431, 1
      %v488 = vsel %vm468, %v485, %v487
      %v489 = vrot.slane %v432, 1
      %v490 = vrot.slane %v433, 1
      %v491 = vsel %vm468, %v489, %v490
      %v492 = vrot.slane %v434, 1
      %v493 = vsel %vm468, %v490, %v492
      %v494 = vrot.slane %v435, 1
      %v495 = vrot.slane %v436, 1
      %v496 = vsel %vm468, %v494, %v495
      %v497 = vrot.slane %v437, 1
      %v498 = vsel %vm468, %v495, %v497
      %v499 = vrot.slane %v438, 1
      %v500 = vrot.slane %v439, 1
      %v501 = vsel %vm468, %v499, %v500
      %v502 = vrot.slane %v440, 1
      %v503 = vsel %vm468, %v500, %v502
      %v504 = vrot.slane %v441, 1
      %v505 = vrot.slane %v442, 1
      %v506 = vsel %vm468, %v504, %v505
      %v507 = vrot.slane %v443, 1
      %v508 = vsel %vm468, %v505, %v507
      %v525 = vadd.f32 %v400, %v471
      %v526 = vadd.f32 %v401, %v473
      %v527 = vadd.f32 %v402, %v476
      %v528 = vadd.f32 %v403, %v478
      %v529 = vadd.f32 %v404, %v481
      %v530 = vadd.f32 %v405, %v483
      %v531 = vadd.f32 %v406, %v486
      %v532 = vadd.f32 %v407, %v488
      %v533 = vadd.f32 %v408, %v491
      %v534 = vadd.f32 %v409, %v493
      %v535 = vadd.f32 %v410, %v496
      %v536 = vadd.f32 %v411, %v498
      %v537 = vadd.f32 %v412, %v501
      %v538 = vadd.f32 %v413, %v503
      %v539 = vadd.f32 %v414, %v506
      %v540 = vadd.f32 %v415, %v508
      %v541 = vlaneseq
      %v542 = vshrl.u32 %v541, 7
      %v543 = vsub.s32 2, %v542
      %v544 = vrot.slane %v347, %v543
      %v545 = vmul.f32 %v350, %v544
      %v546 = vmul.f32 %v351, %v544
      %v547 = vmul.f32 %v352, %v544
      %v548 = vmul.f32 %v353, %v544
      %v549 = vmul.f32 %v354, %v544
      %v550 = vmul.f32 %v355, %v544
      %v551 = vmul.f32 %v356, %v544
      %v552 = vmul.f32 %v357, %v544
      %v553 = vmul.f32 %v358, %v544
      %v554 = vmul.f32 %v359, %v544
      %v555 = vmul.f32 %v360, %v544
      %v556 = vmul.f32 %v361, %v544
      %v557 = vmul.f32 %v362, %v544
      %v558 = vmul.f32 %v363, %v544
      %v559 = vmul.f32 %v364, %v544
      %v560 = vmul.f32 %v365, %v544
      %v561 = vmul.f32 %v366, %v544
      %v562 = vmul.f32 %v367, %v544
      %v563 = vmul.f32 %v368, %v544
      %v564 = vmul.f32 %v369, %v544
      %v565 = vmul.f32 %v370, %v544
      %v566 = vmul.f32 %v371, %v544
      %v567 = vmul.f32 %v372, %v544
      %v568 = vmul.f32 %v373, %v544
      %vm593 = vcmask 1045504
      %v594 = vrot.slane %v545, 2
      %v595 = vrot.slane %v546, 2
      %v596 = vsel %vm593, %v594, %v595
      %v597 = vrot.slane %v547, 2
      %v598 = vsel %vm593, %v595, %v597
      %v599 = vrot.slane %v548, 2
      %v600 = vrot.slane %v549, 2
      %v601 = vsel %vm593, %v599, %v600
      %v602 = vrot.slane %v550, 2
      %v603 = vsel %vm593, %v600, %v602
      %v604 = vrot.slane %v551, 2
      %v605 = vrot.slane %v552, 2
      %v606 = vsel %vm593, %v604, %v605
      %v607 = vrot.slane %v553, 2
      %v608 = vsel %vm593, %v605, %v607
      %v609 = vrot.slane %v554, 2
      %v610 = vrot.slane %v555, 2
      %v611 = vsel %vm593, %v609, %v610
      %v612 = vrot.slane %v556, 2
      %v613 = vsel %vm593, %v610, %v612
      %v614 = vrot.slane %v557, 2
      %v615 = vrot.slane %v558, 2
      %v616 = vsel %vm593, %v614, %v615
      %v617 = vrot.slane %v559, 2
      %v618 = vsel %vm593, %v615, %v617
      %v619 = vrot.slane %v560, 2
      %v620 = vrot.slane %v561, 2
      %v621 = vsel %vm593, %v619, %v620
      %v622 = vrot.slane %v562, 2
      %v623 = vsel %vm593, %v620, %v622
      %v624 = vrot.slane %v563, 2
      %v625 = vrot.slane %v564, 2
      %v626 = vsel %vm593, %v624, %v625
      %v627 = vrot.slane %v565, 2
      %v628 = vsel %vm593, %v625, %v627
      %v629 = vrot.slane %v566, 2
      %v630 = vrot.slane %v567, 2
      %v631 = vsel %vm593, %v629, %v630
      %v632 = vrot.slane %v568, 2
      %v633 = vsel %vm593, %v630, %v632
      %v650 = vadd.f32 %v525, %v596
      %v651 = vadd.f32 %v526, %v598
      %v652 = vadd.f32 %v527, %v601
      %v653 = vadd.f32 %v528, %v603
      %v654 = vadd.f32 %v529, %v606
      %v655 = vadd.f32 %v530, %v608
      %v656 = vadd.f32 %v531, %v611
      %v657 = vadd.f32 %v532, %v613
      %v658 = vadd.f32 %v533, %v616
      %v659 = vadd.f32 %v534, %v618
      %v660 = vadd.f32 %v535, %v621
      %v661 = vadd.f32 %v536, %v623
      %v662 = vadd.f32 %v537, %v626
      %v663 = vadd.f32 %v538, %v628
      %v664 = vadd.f32 %v539, %v631
      %v665 = vadd.f32 %v540, %v633
      %v666 = vlaneseq
      %v667 = vshrl.u32 %v666, 7
      %v668 = vsub.s32 0, %v667
      %v669 = vrot.slane %v348, %v668
      %v670 = vmul.f32 %v353, %v669
      %v671 = vmul.f32 %v354, %v669
      %v672 = vmul.f32 %v356, %v669
      %v673 = vmul.f32 %v357, %v669
      %v674 = vmul.f32 %v359, %v669
      %v675 = vmul.f32 %v360, %v669
      %v676 = vmul.f32 %v362, %v669
      %v677 = vmul.f32 %v363, %v669
      %v678 = vmul.f32 %v365, %v669
      %v679 = vmul.f32 %v366, %v669
      %v680 = vmul.f32 %v368, %v669
      %v681 = vmul.f32 %v369, %v669
      %v682 = vmul.f32 %v371, %v669
      %v683 = vmul.f32 %v372, %v669
      %v684 = vmul.f32 %v374, %v669
      %v685 = vmul.f32 %v375, %v669
      %v686 = vadd.f32 %v650, %v670
      %v687 = vadd.f32 %v651, %v671
      %v688 = vadd.f32 %v652, %v672
      %v689 = vadd.f32 %v653, %v673
      %v690 = vadd.f32 %v654, %v674
      %v691 = vadd.f32 %v655, %v675
      %v692 = vadd.f32 %v656, %v676
      %v693 = vadd.f32 %v657, %v677
      %v694 = vadd.f32 %v658, %v678
      %v695 = vadd.f32 %v659, %v679
      %v696 = vadd.f32 %v660, %v680
      %v697 = vadd.f32 %v661, %v681
      %v698 = vadd.f32 %v662, %v682
      %v699 = vadd.f32 %v663, %v683
      %v700 = vadd.f32 %v664, %v684
      %v701 = vadd.f32 %v665, %v685
      %v702 = vlaneseq
      %v703 = vshrl.u32 %v702, 7
      %v704 = vsub.s32 1, %v703
      %v705 = vrot.slane %v348, %v704
      %v706 = vmul.f32 %v353, %v705
      %v707 = vmul.f32 %v354, %v705
      %v708 = vmul.f32 %v355, %v705
      %v709 = vmul.f32 %v356, %v705
      %v710 = vmul.f32 %v357, %v705
      %v711 = vmul.f32 %v358, %v705
      %v712 = vmul.f32 %v359, %v705
      %v713 = vmul.f32 %v360, %v705
      %v714 = vmul.f32 %v361, %v705
      %v715 = vmul.f32 %v362, %v705
      %v716 = vmul.f32 %v363, %v705
      %v717 = vmul.f32 %v364, %v705
      %v718 = vmul.f32 %v365, %v705
      %v719 = vmul.f32 %v366, %v705
      %v720 = vmul.f32 %v367, %v705
      %v721 = vmul.f32 %v368, %v705
      %v722 = vmul.f32 %v369, %v705
      %v723 = vmul.f32 %v370, %v705
      %v724 = vmul.f32 %v371, %v705
      %v725 = vmul.f32 %v372, %v705
      %v726 = vmul.f32 %v373, %v705
      %v727 = vmul.f32 %v374, %v705
      %v728 = vmul.f32 %v375, %v705
      %v729 = vmul.f32 %v376, %v705
      %v754 = vrot.slane %v706, 1
      %v755 = vrot.slane %v707, 1
      %v756 = vsel %vm468, %v754, %v755
      %v757 = vrot.slane %v708, 1
      %v758 = vsel %vm468, %v755, %v757
      %v759 = vrot.slane %v709, 1
      %v760 = vrot.slane %v710, 1
      %v761 = vsel %vm468, %v759, %v760
      %v762 = vrot.slane %v711, 1
      %v763 = vsel %vm468, %v760, %v762
      %v764 = vrot.slane %v712, 1
      %v765 = vrot.slane %v713, 1
      %v766 = vsel %vm468, %v764, %v765
      %v767 = vrot.slane %v714, 1
      %v768 = vsel %vm468, %v765, %v767
      %v769 = vrot.slane %v715, 1
      %v770 = vrot.slane %v716, 1
      %v771 = vsel %vm468, %v769, %v770
      %v772 = vrot.slane %v717, 1
      %v773 = vsel %vm468, %v770, %v772
      %v774 = vrot.slane %v718, 1
      %v775 = vrot.slane %v719, 1
      %v776 = vsel %vm468, %v774, %v775
      %v777 = vrot.slane %v720, 1
      %v778 = vsel %vm468, %v775, %v777
      %v779 = vrot.slane %v721, 1
      %v780 = vrot.slane %v722, 1
      %v781 = vsel %vm468, %v779, %v780
      %v782 = vrot.slane %v723, 1
      %v783 = vsel %vm468, %v780, %v782
      %v784 = vrot.slane %v724, 1
      %v785 = vrot.slane %v725, 1
      %v786 = vsel %vm468, %v784, %v785
      %v787 = vrot.slane %v726, 1
      %v788 = vsel %vm468, %v785, %v787
      %v789 = vrot.slane %v727, 1
      %v790 = vrot.slane %v728, 1
      %v791 = vsel %vm468, %v789, %v790
      %v792 = vrot.slane %v729, 1
      %v793 = vsel %vm468, %v790, %v792
      %v810 = vadd.f32 %v686, %v756
      %v811 = vadd.f32 %v687, %v758
      %v812 = vadd.f32 %v688, %v761
      %v813 = vadd.f32 %v689, %v763
      %v814 = vadd.f32 %v690, %v766
      %v815 = vadd.f32 %v691, %v768
      %v816 = vadd.f32 %v692, %v771
      %v817 = vadd.f32 %v693, %v773
      %v818 = vadd.f32 %v694, %v776
      %v819 = vadd.f32 %v695, %v778
      %v820 = vadd.f32 %v696, %v781
      %v821 = vadd.f32 %v697, %v783
      %v822 = vadd.f32 %v698, %v786
      %v823 = vadd.f32 %v699, %v788
      %v824 = vadd.f32 %v700, %v791
      %v825 = vadd.f32 %v701, %v793
      %v826 = vlaneseq
      %v827 = vshrl.u32 %v826, 7
      %v828 = vsub.s32 2, %v827
      %v829 = vrot.slane %v348, %v828
      %v830 = vmul.f32 %v353, %v829
      %v831 = vmul.f32 %v354, %v829
      %v832 = vmul.f32 %v355, %v829
      %v833 = vmul.f32 %v356, %v829
      %v834 = vmul.f32 %v357, %v829
      %v835 = vmul.f32 %v358, %v829
      %v836 = vmul.f32 %v359, %v829
      %v837 = vmul.f32 %v360, %v829
      %v838 = vmul.f32 %v361, %v829
      %v839 = vmul.f32 %v362, %v829
      %v840 = vmul.f32 %v363, %v829
      %v841 = vmul.f32 %v364, %v829
      %v842 = vmul.f32 %v365, %v829
      %v843 = vmul.f32 %v366, %v829
      %v844 = vmul.f32 %v367, %v829
      %v845 = vmul.f32 %v368, %v829
      %v846 = vmul.f32 %v369, %v829
      %v847 = vmul.f32 %v370, %v829
      %v848 = vmul.f32 %v371, %v829
      %v849 = vmul.f32 %v372, %v829
      %v850 = vmul.f32 %v373, %v829
      %v851 = vmul.f32 %v374, %v829
      %v852 = vmul.f32 %v375, %v829
      %v853 = vmul.f32 %v376, %v829
      %v878 = vrot.slane %v830, 2
      %v879 = vrot.slane %v831, 2
      %v880 = vsel %vm593, %v878, %v879
      %v881 = vrot.slane %v832, 2
      %v882 = vsel %vm593, %v879, %v881
      %v883 = vrot.slane %v833, 2
      %v884 = vrot.slane %v834, 2
      %v885 = vsel %vm593, %v883, %v884
      %v886 = vrot.slane %v835, 2
      %v887 = vsel %vm593, %v884, %v886
      %v888 = vrot.slane %v836, 2
      %v889 = vrot.slane %v837, 2
      %v890 = vsel %vm593, %v888, %v889
      %v891 = vrot.slane %v838, 2
      %v892 = vsel %vm593, %v889, %v891
      %v893 = vrot.slane %v839, 2
      %v894 = vrot.slane %v840, 2
      %v895 = vsel %vm593, %v893, %v894
      %v896 = vrot.slane %v841, 2
      %v897 = vsel %vm593, %v894, %v896
      %v898 = vrot.slane %v842, 2
      %v899 = vrot.slane %v843, 2
      %v900 = vsel %vm593, %v898, %v899
      %v901 = vrot.slane %v844, 2
      %v902 = vsel %vm593, %v899, %v901
      %v903 = vrot.slane %v845, 2
      %v904 = vrot.slane %v846, 2
      %v905 = vsel %vm593, %v903, %v904
      %v906 = vrot.slane %v847, 2
      %v907 = vsel %vm593, %v904, %v906
      %v908 = vrot.slane %v848, 2
      %v909 = vrot.slane %v849, 2
      %v910 = vsel %vm593, %v908, %v909
      %v911 = vrot.slane %v850, 2
      %v912 = vsel %vm593, %v909, %v911
      %v913 = vrot.slane %v851, 2
      %v914 = vrot.slane %v852, 2
      %v915 = vsel %vm593, %v913, %v914
      %v916 = vrot.slane %v853, 2
      %v917 = vsel %vm593, %v914, %v916
      %v934 = vadd.f32 %v810, %v880
      %v935 = vadd.f32 %v811, %v882
      %v936 = vadd.f32 %v812, %v885
      %v937 = vadd.f32 %v813, %v887
      %v938 = vadd.f32 %v814, %v890
      %v939 = vadd.f32 %v815, %v892
      %v940 = vadd.f32 %v816, %v895
      %v941 = vadd.f32 %v817, %v897
      %v942 = vadd.f32 %v818, %v900
      %v943 = vadd.f32 %v819, %v902
      %v944 = vadd.f32 %v820, %v905
      %v945 = vadd.f32 %v821, %v907
      %v946 = vadd.f32 %v822, %v910
      %v947 = vadd.f32 %v823, %v912
      %v948 = vadd.f32 %v824, %v915
      %v949 = vadd.f32 %v825, %v917
      %v950 = vlaneseq
      %v951 = vshrl.u32 %v950, 7
      %v952 = vsub.s32 0, %v951
      %v953 = vrot.slane %v349, %v952
      %v954 = vmul.f32 %v356, %v953
      %v955 = vmul.f32 %v357, %v953
      %v956 = vmul.f32 %v359, %v953
      %v957 = vmul.f32 %v360, %v953
      %v958 = vmul.f32 %v362, %v953
      %v959 = vmul.f32 %v363, %v953
      %v960 = vmul.f32 %v365, %v953
      %v961 = vmul.f32 %v366, %v953
      %v962 = vmul.f32 %v368, %v953
      %v963 = vmul.f32 %v369, %v953
      %v964 = vmul.f32 %v371, %v953
      %v965 = vmul.f32 %v372, %v953
      %v966 = vmul.f32 %v374, %v953
      %v967 = vmul.f32 %v375, %v953
      %v968 = vmul.f32 %v377, %v953
      %v969 = vmul.f32 %v378, %v953
      %v970 = vadd.f32 %v934, %v954
      %v971 = vadd.f32 %v935, %v955
      %v972 = vadd.f32 %v936, %v956
      %v973 = vadd.f32 %v937, %v957
      %v974 = vadd.f32 %v938, %v958
      %v975 = vadd.f32 %v939, %v959
      %v976 = vadd.f32 %v940, %v960
      %v977 = vadd.f32 %v941, %v961
      %v978 = vadd.f32 %v942, %v962
      %v979 = vadd.f32 %v943, %v963
      %v980 = vadd.f32 %v944, %v964
      %v981 = vadd.f32 %v945, %v965
      %v982 = vadd.f32 %v946, %v966
      %v983 = vadd.f32 %v947, %v967
      %v984 = vadd.f32 %v948, %v968
      %v985 = vadd.f32 %v949, %v969
      %v986 = vlaneseq
      %v987 = vshrl.u32 %v986, 7
      %v988 = vsub.s32 1, %v987
      %v989 = vrot.slane %v349, %v988
      %v990 = vmul.f32 %v356, %v989
      %v991 = vmul.f32 %v357, %v989
      %v992 = vmul.f32 %v358, %v989
      %v993 = vmul.f32 %v359, %v989
      %v994 = vmul.f32 %v360, %v989
      %v995 = vmul.f32 %v361, %v989
      %v996 = vmul.f32 %v362, %v989
      %v997 = vmul.f32 %v363, %v989
      %v998 = vmul.f32 %v364, %v989
      %v999 = vmul.f32 %v365, %v989
      %v1000 = vmul.f32 %v366, %v989
      %v1001 = vmul.f32 %v367, %v989
      %v1002 = vmul.f32 %v368, %v989
      %v1003 = vmul.f32 %v369, %v989
      %v1004 = vmul.f32 %v370, %v989
      %v1005 = vmul.f32 %v371, %v989
      %v1006 = vmul.f32 %v372, %v989
      %v1007 = vmul.f32 %v373, %v989
      %v1008 = vmul.f32 %v374, %v989
      %v1009 = vmul.f32 %v375, %v989
      %v1010 = vmul.f32 %v376, %v989
      %v1011 = vmul.f32 %v377, %v989
      %v1012 = vmul.f32 %v378, %v989
      %v1013 = vmul.f32 %v379, %v989
      %v1038 = vrot.slane %v990, 1
      %v1039 = vrot.slane %v991, 1
      %v1040 = vsel %vm468, %v1038, %v1039
      %v1041 = vrot.slane %v992, 1
      %v1042 = vsel %vm468, %v1039, %v1041
      %v1043 = vrot.slane %v993, 1
      %v1044 = vrot.slane %v994, 1
      %v1045 = vsel %vm468, %v1043, %v1044
      %v1046 = vrot.slane %v995, 1
      %v1047 = vsel %vm468, %v1044, %v1046
      %v1048 = vrot.slane %v996, 1
      %v1049 = vrot.slane %v997, 1
      %v1050 = vsel %vm468, %v1048, %v1049
      %v1051 = vrot.slane %v998, 1
      %v1052 = vsel %vm468, %v1049, %v1051
      %v1053 = vrot.slane %v999, 1
      %v1054 = vrot.slane %v1000, 1
      %v1055 = vsel %vm468, %v1053, %v1054
      %v1056 = vrot.slane %v1001, 1
      %v1057 = vsel %vm468, %v1054, %v1056
      %v1058 = vrot.slane %v1002, 1
      %v1059 = vrot.slane %v1003, 1
      %v1060 = vsel %vm468, %v1058, %v1059
      %v1061 = vrot.slane %v1004, 1
      %v1062 = vsel %vm468, %v1059, %v1061
      %v1063 = vrot.slane %v1005, 1
      %v1064 = vrot.slane %v1006, 1
      %v1065 = vsel %vm468, %v1063, %v1064
      %v1066 = vrot.slane %v1007, 1
      %v1067 = vsel %vm468, %v1064, %v1066
      %v1068 = vrot.slane %v1008, 1
      %v1069 = vrot.slane %v1009, 1
      %v1070 = vsel %vm468, %v1068, %v1069
      %v1071 = vrot.slane %v1010, 1
      %v1072 = vsel %vm468, %v1069, %v1071
      %v1073 = vrot.slane %v1011, 1
      %v1074 = vrot.slane %v1012, 1
      %v1075 = vsel %vm468, %v1073, %v1074
      %v1076 = vrot.slane %v1013, 1
      %v1077 = vsel %vm468, %v1074, %v1076
      %v1094 = vadd.f32 %v970, %v1040
      %v1095 = vadd.f32 %v971, %v1042
      %v1096 = vadd.f32 %v972, %v1045
      %v1097 = vadd.f32 %v973, %v1047
      %v1098 = vadd.f32 %v974, %v1050
      %v1099 = vadd.f32 %v975, %v1052
      %v1100 = vadd.f32 %v976, %v1055
      %v1101 = vadd.f32 %v977, %v1057
      %v1102 = vadd.f32 %v978, %v1060
      %v1103 = vadd.f32 %v979, %v1062
      %v1104 = vadd.f32 %v980, %v1065
      %v1105 = vadd.f32 %v981, %v1067
      %v1106 = vadd.f32 %v982, %v1070
      %v1107 = vadd.f32 %v983, %v1072
      %v1108 = vadd.f32 %v984, %v1075
      %v1109 = vadd.f32 %v985, %v1077
      %v1110 = vlaneseq
      %v1111 = vshrl.u32 %v1110, 7
      %v1112 = vsub.s32 2, %v1111
      %v1113 = vrot.slane %v349, %v1112
      %v1114 = vmul.f32 %v356, %v1113
      %v1115 = vmul.f32 %v357, %v1113
      %v1116 = vmul.f32 %v358, %v1113
      %v1117 = vmul.f32 %v359, %v1113
      %v1118 = vmul.f32 %v360, %v1113
      %v1119 = vmul.f32 %v361, %v1113
      %v1120 = vmul.f32 %v362, %v1113
      %v1121 = vmul.f32 %v363, %v1113
      %v1122 = vmul.f32 %v364, %v1113
      %v1123 = vmul.f32 %v365, %v1113
      %v1124 = vmul.f32 %v366, %v1113
      %v1125 = vmul.f32 %v367, %v1113
      %v1126 = vmul.f32 %v368, %v1113
      %v1127 = vmul.f32 %v369, %v1113
      %v1128 = vmul.f32 %v370, %v1113
      %v1129 = vmul.f32 %v371, %v1113
      %v1130 = vmul.f32 %v372, %v1113
      %v1131 = vmul.f32 %v373, %v1113
      %v1132 = vmul.f32 %v374, %v1113
      %v1133 = vmul.f32 %v375, %v1113
      %v1134 = vmul.f32 %v376, %v1113
      %v1135 = vmul.f32 %v377, %v1113
      %v1136 = vmul.f32 %v378, %v1113
      %v1137 = vmul.f32 %v379, %v1113
      %v1162 = vrot.slane %v1114, 2
      %v1163 = vrot.slane %v1115, 2
      %v1164 = vsel %vm593, %v1162, %v1163
      %v1165 = vrot.slane %v1116, 2
      %v1166 = vsel %vm593, %v1163, %v1165
      %v1167 = vrot.slane %v1117, 2
      %v1168 = vrot.slane %v1118, 2
      %v1169 = vsel %vm593, %v1167, %v1168
      %v1170 = vrot.slane %v1119, 2
      %v1171 = vsel %vm593, %v1168, %v1170
      %v1172 = vrot.slane %v1120, 2
      %v1173 = vrot.slane %v1121, 2
      %v1174 = vsel %vm593, %v1172, %v1173
      %v1175 = vrot.slane %v1122, 2
      %v1176 = vsel %vm593, %v1173, %v1175
      %v1177 = vrot.slane %v1123, 2
      %v1178 = vrot.slane %v1124, 2
      %v1179 = vsel %vm593, %v1177, %v1178
      %v1180 = vrot.slane %v1125, 2
      %v1181 = vsel %vm593, %v1178, %v1180
      %v1182 = vrot.slane %v1126, 2
      %v1183 = vrot.slane %v1127, 2
      %v1184 = vsel %vm593, %v1182, %v1183
      %v1185 = vrot.slane %v1128, 2
      %v1186 = vsel %vm593, %v1183, %v1185
      %v1187 = vrot.slane %v1129, 2
      %v1188 = vrot.slane %v1130, 2
      %v1189 = vsel %vm593, %v1187, %v1188
      %v1190 = vrot.slane %v1131, 2
      %v1191 = vsel %vm593, %v1188, %v1190
      %v1192 = vrot.slane %v1132, 2
      %v1193 = vrot.slane %v1133, 2
      %v1194 = vsel %vm593, %v1192, %v1193
      %v1195 = vrot.slane %v1134, 2
      %v1196 = vsel %vm593, %v1193, %v1195
      %v1197 = vrot.slane %v1135, 2
      %v1198 = vrot.slane %v1136, 2
      %v1199 = vsel %vm593, %v1197, %v1198
      %v1200 = vrot.slane %v1137, 2
      %v1201 = vsel %vm593, %v1198, %v1200
      %v1218 = vadd.f32 %v1094, %v1164
      %v1219 = vadd.f32 %v1095, %v1166
      %v1220 = vadd.f32 %v1096, %v1169
      %v1221 = vadd.f32 %v1097, %v1171
      %v1222 = vadd.f32 %v1098, %v1174
      %v1223 = vadd.f32 %v1099, %v1176
      %v1224 = vadd.f32 %v1100, %v1179
      %v1225 = vadd.f32 %v1101, %v1181
      %v1226 = vadd.f32 %v1102, %v1184
      %v1227 = vadd.f32 %v1103, %v1186
      %v1228 = vadd.f32 %v1104, %v1189
      %v1229 = vadd.f32 %v1105, %v1191
      %v1230 = vadd.f32 %v1106, %v1194
      %v1231 = vadd.f32 %v1107, %v1196
      %v1232 = vadd.f32 %v1108, %v1199
      %v1233 = vadd.f32 %v1109, %v1201
      %vm1234 = vcmask 31744
      %1235 = vst.msk [vmem:[#allocation2] sm:$0xff] %vm1234, %v1218
      %1236 = vst.msk [vmem:[#allocation2 + $0x8] sm:$0xff] %vm1234, %v1219
      %1237 = vst.msk [vmem:[#allocation2 + $0x10] sm:$0xff] %vm1234, %v1220
      %1238 = vst.msk [vmem:[#allocation2 + $0x18] sm:$0xff] %vm1234, %v1221
      %1239 = vst.msk [vmem:[#allocation2 + $0x20] sm:$0xff] %vm1234, %v1222
      %1240 = vst.msk [vmem:[#allocation2 + $0x28] sm:$0xff] %vm1234, %v1223
      %1241 = vst.msk [vmem:[#allocation2 + $0x30] sm:$0xff] %vm1234, %v1224
      %1242 = vst.msk [vmem:[#allocation2 + $0x38] sm:$0xff] %vm1234, %v1225
      %1243 = vst.msk [vmem:[#allocation2 + $0x40] sm:$0xff] %vm1234, %v1226
      %1244 = vst.msk [vmem:[#allocation2 + $0x48] sm:$0xff] %vm1234, %v1227
      %1245 = vst.msk [vmem:[#allocation2 + $0x50] sm:$0xff] %vm1234, %v1228
      %1246 = vst.msk [vmem:[#allocation2 + $0x58] sm:$0xff] %vm1234, %v1229
      %1247 = vst.msk [vmem:[#allocation2 + $0x60] sm:$0xff] %vm1234, %v1230
      %1248 = vst.msk [vmem:[#allocation2 + $0x68] sm:$0xff] %vm1234, %v1231
      %1249 = vst.msk [vmem:[#allocation2 + $0x70] sm:$0xff] %vm1234, %v1232
      %1250 = vst.msk [vmem:[#allocation2 + $0x78] sm:$0xff] %vm1234, %v1233
      %v1251 = vld [vmem:[#allocation2] sm:$0xff]
      %v1252 = vld [vmem:[#allocation2 + $0x8] sm:$0xff]
      %v1253 = vld [vmem:[#allocation2 + $0x10] sm:$0xff]
      %v1254 = vld [vmem:[#allocation2 + $0x18] sm:$0xff]
      %v1255 = vld [vmem:[#allocation2 + $0x20] sm:$0xff]
      %v1256 = vld [vmem:[#allocation2 + $0x28] sm:$0xff]
      %v1257 = vld [vmem:[#allocation2 + $0x30] sm:$0xff]
      %v1258 = vld [vmem:[#allocation2 + $0x38] sm:$0xff]
      %v1259 = vld [vmem:[#allocation2 + $0x40] sm:$0xff]
      %v1260 = vld [vmem:[#allocation2 + $0x48] sm:$0xff]
      %v1261 = vld [vmem:[#allocation2 + $0x50] sm:$0xff]
      %v1262 = vld [vmem:[#allocation2 + $0x58] sm:$0xff]
      %v1263 = vld [vmem:[#allocation2 + $0x60] sm:$0xff]
      %v1264 = vld [vmem:[#allocation2 + $0x68] sm:$0xff]
      %v1265 = vld [vmem:[#allocation2 + $0x70] sm:$0xff]
      %v1266 = vld [vmem:[#allocation2 + $0x78] sm:$0xff]
      %v1267 = vld [vmem:[%s3] sm:$0xf]
      %v1268 = vld [vmem:[%s4] sm:$0x1]
      %v1270 = vlaneseq
      %v1271 = vshrl.u32 %v1270, 7
      %v1272 = vsub.s32 0, %v1271
      %v1273 = vrot.slane %v1268, %v1272
      %v1276 = vsel %vm1234, %v1251, 0
      %v1279 = vsel %vm1234, %v1252, 0
      %v1282 = vsel %vm1234, %v1253, 0
      %v1285 = vsel %vm1234, %v1254, 0
      %v1288 = vsel %vm1234, %v1255, 0
      %v1291 = vsel %vm1234, %v1256, 0
      %v1294 = vsel %vm1234, %v1257, 0
      %v1297 = vsel %vm1234, %v1258, 0
      %v1300 = vsel %vm1234, %v1259, 0
      %v1303 = vsel %vm1234, %v1260, 0
      %v1306 = vsel %vm1234, %v1261, 0
      %v1309 = vsel %vm1234, %v1262, 0
      %v1312 = vsel %vm1234, %v1263, 0
      %v1315 = vsel %vm1234, %v1264, 0
      %v1318 = vsel %vm1234, %v1265, 0
      %v1321 = vsel %vm1234, %v1266, 0
      %vm1323 = vcmask 1043456
      %v1325 = vsel %vm1323, %v1267, 0
      %1327 = vmatprep.subr.mxu0 0.0
      %1328 = vmatpush1.msra.mxu0 %v1325
      %1329 = vmatprep.subr.mxu0 0.0
      %1330 = vmatpush1.msra.mxu0 0.0
      %1331 = vmatprep.subr.mxu0 0.0
      %1332 = vmatpush1.msra.mxu0 0.0
      %1333 = vmatprep.subr.mxu0 0.0
      %1334 = vmatpush1.msra.mxu0 0.0
      %1335 = vmatprep.subr.mxu0 0.0
      %1336 = vmatpush1.msra.mxu0 0.0
      %1337 = vmatprep.subr.mxu0 0.0
      %1338 = vmatpush1.msra.mxu0 0.0
      %1339 = vmatprep.subr.mxu0 0.0
      %1340 = vmatpush1.msra.mxu0 0.0
      %1341 = vmatprep.subr.mxu0 0.0
      %1342 = vmatpush1.msra.mxu0 0.0
      %1343 = vmatprep.subr.mxu0 0.0
      %1344 = vmatpush1.msra.mxu0 0.0
      %1345 = vmatprep.subr.mxu0 0.0
      %1346 = vmatpush1.msra.mxu0 0.0
      %1347 = vmatprep.subr.mxu0 0.0
      %1348 = vmatpush1.msra.mxu0 0.0
      %1349 = vmatprep.subr.mxu0 0.0
      %1350 = vmatpush1.msra.mxu0 0.0
      %1351 = vmatprep.subr.mxu0 0.0
      %1352 = vmatpush1.msra.mxu0 0.0
      %1353 = vmatprep.subr.mxu0 0.0
      %1354 = vmatpush1.msra.mxu0 0.0
      %1355 = vmatprep.subr.mxu0 0.0
      %1356 = vmatpush1.msra.mxu0 0.0
      %1357 = vmatprep.subr.mxu0 0.0
      %1358 = vmatpush1.msra.mxu0 0.0
      %1359 = vmatprep.subr.mxu0 0.0
      %1360 = vmatpush1.msra.mxu0 0.0
      %1361 = vmatprep.subr.mxu0 0.0
      %1362 = vmatpush1.msra.mxu0 0.0
      %1363 = vmatprep.subr.mxu0 0.0
      %1364 = vmatpush1.msra.mxu0 0.0
      %1365 = vmatprep.subr.mxu0 0.0
      %1366 = vmatpush1.msra.mxu0 0.0
      %1367 = vmatprep.subr.mxu0 0.0
      %1368 = vmatpush1.msra.mxu0 0.0
      %1369 = vmatprep.subr.mxu0 0.0
      %1370 = vmatpush1.msra.mxu0 0.0
      %1371 = vmatprep.subr.mxu0 0.0
      %1372 = vmatpush1.msra.mxu0 0.0
      %1373 = vmatprep.subr.mxu0 0.0
      %1374 = vmatpush1.msra.mxu0 0.0
      %1375 = vmatprep.subr.mxu0 0.0
      %1376 = vmatpush1.msra.mxu0 0.0
      %1377 = vmatprep.subr.mxu0 0.0
      %1378 = vmatpush1.msra.mxu0 0.0
      %1379 = vmatprep.subr.mxu0 0.0
      %1380 = vmatpush1.msra.mxu0 0.0
      %1381 = vmatprep.subr.mxu0 0.0
      %1382 = vmatpush1.msra.mxu0 0.0
      %1383 = vmatprep.subr.mxu0 0.0
      %1384 = vmatpush1.msra.mxu0 0.0
      %1385 = vmatprep.subr.mxu0 0.0
      %1386 = vmatpush1.msra.mxu0 0.0
      %1387 = vmatprep.subr.mxu0 0.0
      %1388 = vmatpush1.msra.mxu0 0.0
      %1389 = vmatprep.subr.mxu0 0.0
      %1390 = vmatpush1.msra.mxu0 0.0
      %1391 = vmatprep.mubr.f32.mxu0 0.0
      %1392 = vmatmul.mubr.f32.gmra.mrb[0].mxu0 %v1276
      %v1393 = vpop.f32.mrb[0].mxu0
      %v1394 = vadd.f32 %v1273, %v1393
      %v1395 = vpop.f32.mrb[0].mxu0
      %1396 = vmatprep.mubr.f32.mxu0 0.0
      %1397 = vmatmul.mubr.f32.gmra.mrb[0].mxu0 %v1279
      %v1398 = vpop.f32.mrb[0].mxu0
      %v1399 = vadd.f32 %v1273, %v1398
      %v1400 = vpop.f32.mrb[0].mxu0
      %1401 = vmatprep.mubr.f32.mxu0 0.0
      %1402 = vmatmul.mubr.f32.gmra.mrb[0].mxu0 %v1282
      %v1403 = vpop.f32.mrb[0].mxu0
      %v1404 = vadd.f32 %v1273, %v1403
      %v1405 = vpop.f32.mrb[0].mxu0
      %1406 = vmatprep.mubr.f32.mxu0 0.0
      %1407 = vmatmul.mubr.f32.gmra.mrb[0].mxu0 %v1285
      %v1408 = vpop.f32.mrb[0].mxu0
      %v1409 = vadd.f32 %v1273, %v1408
      %v1410 = vpop.f32.mrb[0].mxu0
      %1411 = vmatprep.mubr.f32.mxu0 0.0
      %1412 = vmatmul.mubr.f32.gmra.mrb[0].mxu0 %v1288
      %v1413 = vpop.f32.mrb[0].mxu0
      %v1414 = vadd.f32 %v1273, %v1413
      %v1415 = vpop.f32.mrb[0].mxu0
      %1416 = vmatprep.mubr.f32.mxu0 0.0
      %1417 = vmatmul.mubr.f32.gmra.mrb[0].mxu0 %v1291
      %v1418 = vpop.f32.mrb[0].mxu0
      %v1419 = vadd.f32 %v1273, %v1418
      %v1420 = vpop.f32.mrb[0].mxu0
      %1421 = vmatprep.mubr.f32.mxu0 0.0
      %1422 = vmatmul.mubr.f32.gmra.mrb[0].mxu0 %v1294
      %v1423 = vpop.f32.mrb[0].mxu0
      %v1424 = vadd.f32 %v1273, %v1423
      %v1425 = vpop.f32.mrb[0].mxu0
      %1426 = vmatprep.mubr.f32.mxu0 0.0
      %1427 = vmatmul.mubr.f32.gmra.mrb[0].mxu0 %v1297
      %v1428 = vpop.f32.mrb[0].mxu0
      %v1429 = vadd.f32 %v1273, %v1428
      %v1430 = vpop.f32.mrb[0].mxu0
      %1431 = vmatprep.mubr.f32.mxu0 0.0
      %1432 = vmatmul.mubr.f32.gmra.mrb[0].mxu0 %v1300
      %v1433 = vpop.f32.mrb[0].mxu0
      %v1434 = vadd.f32 %v1273, %v1433
      %v1435 = vpop.f32.mrb[0].mxu0
      %1436 = vmatprep.mubr.f32.mxu0 0.0
      %1437 = vmatmul.mubr.f32.gmra.mrb[0].mxu0 %v1303
      %v1438 = vpop.f32.mrb[0].mxu0
      %v1439 = vadd.f32 %v1273, %v1438
      %v1440 = vpop.f32.mrb[0].mxu0
      %1441 = vmatprep.mubr.f32.mxu0 0.0
      %1442 = vmatmul.mubr.f32.gmra.mrb[0].mxu0 %v1306
      %v1443 = vpop.f32.mrb[0].mxu0
      %v1444 = vadd.f32 %v1273, %v1443
      %v1445 = vpop.f32.mrb[0].mxu0
      %1446 = vmatprep.mubr.f32.mxu0 0.0
      %1447 = vmatmul.mubr.f32.gmra.mrb[0].mxu0 %v1309
      %v1448 = vpop.f32.mrb[0].mxu0
      %v1449 = vadd.f32 %v1273, %v1448
      %v1450 = vpop.f32.mrb[0].mxu0
      %1451 = vmatprep.mubr.f32.mxu0 0.0
      %1452 = vmatmul.mubr.f32.gmra.mrb[0].mxu0 %v1312
      %v1453 = vpop.f32.mrb[0].mxu0
      %v1454 = vadd.f32 %v1273, %v1453
      %v1455 = vpop.f32.mrb[0].mxu0
      %1456 = vmatprep.mubr.f32.mxu0 0.0
      %1457 = vmatmul.mubr.f32.gmra.mrb[0].mxu0 %v1315
      %v1458 = vpop.f32.mrb[0].mxu0
      %v1459 = vadd.f32 %v1273, %v1458
      %v1460 = vpop.f32.mrb[0].mxu0
      %1461 = vmatprep.mubr.f32.mxu0 0.0
      %1462 = vmatmul.mubr.f32.gmra.mrb[0].mxu0 %v1318
      %v1463 = vpop.f32.mrb[0].mxu0
      %v1464 = vadd.f32 %v1273, %v1463
      %v1465 = vpop.f32.mrb[0].mxu0
      %1466 = vmatprep.mubr.f32.mxu0 0.0
      %1467 = vmatmul.mubr.f32.gmra.mrb[0].mxu0 %v1321
      %v1468 = vpop.f32.mrb[0].mxu0
      %v1469 = vadd.f32 %v1273, %v1468
      %v1470 = vpop.f32.mrb[0].mxu0
      %1471 = vdwg.mxu0
      %vm1472 = vcmask 64512
      %1473 = vst.msk [vmem:[%s345] sm:$0xff] %vm1472, %v1394
      %1474 = vst.msk [vmem:[%s345 + $0x8] sm:$0xff] %vm1472, %v1399
      %1475 = vst.msk [vmem:[%s345 + $0x10] sm:$0xff] %vm1472, %v1404
      %1476 = vst.msk [vmem:[%s345 + $0x18] sm:$0xff] %vm1472, %v1409
      %1477 = vst.msk [vmem:[%s345 + $0x20] sm:$0xff] %vm1472, %v1414
      %1478 = vst.msk [vmem:[%s345 + $0x28] sm:$0xff] %vm1472, %v1419
      %1479 = vst.msk [vmem:[%s345 + $0x30] sm:$0xff] %vm1472, %v1424
      %1480 = vst.msk [vmem:[%s345 + $0x38] sm:$0xff] %vm1472, %v1429
      %1481 = vst.msk [vmem:[%s345 + $0x40] sm:$0xff] %vm1472, %v1434
      %1482 = vst.msk [vmem:[%s345 + $0x48] sm:$0xff] %vm1472, %v1439
      %1483 = vst.msk [vmem:[%s345 + $0x50] sm:$0xff] %vm1472, %v1444
      %1484 = vst.msk [vmem:[%s345 + $0x58] sm:$0xff] %vm1472, %v1449
      %1485 = vst.msk [vmem:[%s345 + $0x60] sm:$0xff] %vm1472, %v1454
      %1486 = vst.msk [vmem:[%s345 + $0x68] sm:$0xff] %vm1472, %v1459
      %1487 = vst.msk [vmem:[%s345 + $0x70] sm:$0xff] %vm1472, %v1464
      %1488 = vst.msk [vmem:[%s345 + $0x78] sm:$0xff] %vm1472, %v1469
      %s1489 = smul.u32 8, %s21
      %p1490 = scmp.lt.s32.totalorder %s20, 1
      %s1491 = scalar_select %p1490, %s20, 1
      %p1492 = scmp.lt.s32.totalorder %s1489, 15
      %s1493 = scalar_select %p1492, %s1489, 15
      %s1494 = smul.addr %s1493, 2
      %s1495 = smul.addr %s1491, 32
      %s1496 = sadd.s32 %s1494, %s1495
      %s1497 = smul.addr %s1496, 8
      %s1498 = scalar_lea.vmem %s5, %s1497
      // Predicated region
      $region41: #{tpu_custom_call.1} parent=39 // pred_check
        %p1499 = pneg %p171
      $region42: #{tpu_custom_call.1} parent=39 // pred_check_branch
        %1501 = sbr.rel (%p1499) target = $region44
      $region43: #{tpu_custom_call.1} parent=39 // pred_region
        %s1502 = smul.u32 8, %s21
      $region44: #{tpu_custom_call.1} parent=39 // pred_fallthru
        _
    $region40: #{tpu_custom_call.1} parent=5 // pred_fallthru
      _
    %p1503 = scmp.le.s32.totalorder 2, %s11
    // Predicated region
    $region45: #{tpu_custom_call.1} parent=5 // pred_check
      %p1504 = pneg %p1503
    $region46: #{tpu_custom_call.1} parent=5 // pred_check_branch
      %1506 = sbr.rel (%p1504) target = $region48
    $region47: #{tpu_custom_call.1} parent=5 // pred_region
      %s1507 = ssub.s32 %s11, 2
      // Predicated region
      $region49: #{tpu_custom_call.1} parent=47 // pred_check
        %p1508 = pneg %p177
      $region50: #{tpu_custom_call.1} parent=47 // pred_check_branch
        %1510 = sbr.rel (%p1508) target = $region52
      $region51: #{tpu_custom_call.1} parent=47 // pred_region
        %s1511 = smul.u32 8, %s23
        %p1512 = scmp.lt.s32.totalorder %s22, 1
        %s1513 = scalar_select %p1512, %s22, 1
        %p1514 = scmp.lt.s32.totalorder %s1511, 15
        %s1515 = scalar_select %p1514, %s1511, 15
        %s1516 = smul.addr %s1515, 2
        %s1517 = smul.addr %s1513, 32
        %s1518 = sadd.s32 %s1516, %s1517
        %s1519 = smul.addr %s1518, 8
        %s1520 = scalar_lea.vmem %s5, %s1519
      $region52: #{tpu_custom_call.1} parent=47 // pred_fallthru
        _
    $region48: #{tpu_custom_call.1} parent=5 // pred_fallthru
      _
  $region6: #{tpu_custom_call.1} parent=0 // loop_footer
    %s15 = sadd.s32 1, %s11
  $region7: #{tpu_custom_call.1} parent=0 // loop_footer_branch
    %10 = sbr.rel target = $region3
  $region8: #{tpu_custom_call.1} parent=0 // loop_exit
    _

</llo_original>
